<compile_context>
chip_gen: v6e
topology: v6e:2x2x1
jax: 0.10.0
libtpu: 0.0.40
codegen_flags: <defaults>
</compile_context>

<pallas_src>
import functools
import math

import jax
import jax.numpy as jnp
from jax.experimental import pallas as pl
from jax.experimental.pallas import tpu as pltpu


_MASK_VALUE = -1e30  # finite "minus infinity" for padded KV columns


# ---------------------------------------------------------------------------
# Pass 1: fused QKV projection   (B, T, C) @ (C, 3C) + b  ->  (B, T, 3C)
# ---------------------------------------------------------------------------
def _qkv_proj_kernel(x_ref, w_ref, b_ref, o_ref):
    acc = jnp.dot(x_ref[0], w_ref[...], preferred_element_type=jnp.float32)
    o_ref[0] = (acc + b_ref[...]).astype(o_ref.dtype)


# ---------------------------------------------------------------------------
# Pass 2: flash attention (online softmax) + fused output projection
# ---------------------------------------------------------------------------
def _flash_kernel(q_ref, k_ref, v_ref, wo_ref, bo_ref, o_ref,
                  m_scr, l_scr, acc_scr, out_scr,
                  *, t_actual, t_padded, tkv):
    h = pl.program_id(2)
    ki = pl.program_id(3)
    last_h = pl.num_programs(2) - 1
    last_kv = pl.num_programs(3) - 1

    # Start of a (batch, query-tile) super-step: zero the fused out-proj acc.
    @pl.when((h == 0) & (ki == 0))
    def _():
        out_scr[...] = jnp.zeros_like(out_scr)

    # Start of a head: reset online-softmax state.
    @pl.when(ki == 0)
    def _():
        m_scr[...] = jnp.full_like(m_scr, -jnp.inf)
        l_scr[...] = jnp.zeros_like(l_scr)
        acc_scr[...] = jnp.zeros_like(acc_scr)

    q = q_ref[0, 0]                          # (tq, hd), pre-scaled by 1/sqrt(hd)
    k = k_ref[0, 0]                          # (tkv, hd)
    v = v_ref[0, 0]                          # (tkv, hd)

    # scores = q @ k^T without an explicit transpose (contract hd of both).
    s = jax.lax.dot_general(q, k, (((1,), (1,)), ((), ())),
                            preferred_element_type=jnp.float32)      # (tq, tkv)

    if t_padded != t_actual:                 # static: only when seq was padded
        col = ki * tkv + jax.lax.broadcasted_iota(jnp.int32, s.shape, 1)
        s = jnp.where(col < t_actual, s, _MASK_VALUE)

    m_prev = m_scr[...]
    m_new = jnp.maximum(m_prev, jnp.max(s, axis=-1, keepdims=True))
    alpha = jnp.exp(m_prev - m_new)
    p = jnp.exp(s - m_new)                   # unnormalized probabilities, f32
    l_scr[...] = alpha * l_scr[...] + jnp.sum(p, axis=-1, keepdims=True)
    acc_scr[...] = alpha * acc_scr[...] + jnp.dot(
        p.astype(v.dtype), v, preferred_element_type=jnp.float32)
    m_scr[...] = m_new

    # End of a head: normalize and fold this head's out-projection slice in.
    @pl.when(ki == last_kv)
    def _():
        attn = acc_scr[...] * pl.reciprocal(l_scr[...], approx=False)  # (tq, hd)
        out_scr[...] += jnp.dot(attn.astype(wo_ref.dtype), wo_ref[0],
                                preferred_element_type=jnp.float32)

    # End of the super-step: add bias, single lane-dense (tq, C) store.
    @pl.when((h == last_h) & (ki == last_kv))
    def _():
        o_ref[0] = (out_scr[...] + bo_ref[...]).astype(o_ref.dtype)


# ---------------------------------------------------------------------------
# Tile / VMEM helpers
# ---------------------------------------------------------------------------
def _pow2_tile(n, base, cap):
    """Smallest power-of-two multiple of `base` that is >= min(n, cap)."""
    t = base
    while t < n and t < cap:
        t *= 2
    return min(t, cap)


def _aligned_divisor(n, align, cap):
    """Largest multiple of `align` dividing n and <= cap; falls back to n."""
    best = None
    d = align
    while d <= min(n, cap):
        if n % d == 0:
            best = d
        d += align
    return best if best is not None else n


def _clamp_vmem(nbytes):
    return int(min(max(nbytes + (4 << 20), 32 << 20), 100 << 20))


# ---------------------------------------------------------------------------
# Wrapper
# ---------------------------------------------------------------------------
def multi_head_self_attention(x, w_qkv, b_qkv, w_out, b_out, num_heads,
                              *, tq_cap=256, tkv_cap=1024, compute_dtype=None):
    """x: (B, T, C); w_qkv: (C, 3C); b_qkv: (3C,); w_out: (C, C); b_out: (C,)."""
    B, T, C = x.shape
    assert C % num_heads == 0, "d_model must be divisible by num_heads"
    H = num_heads
    hd = C // H
    inv_scale = 1.0 / math.sqrt(hd)

    if compute_dtype is not None:
        # bf16 operands halve every DMA byte and ~double MXU throughput;
        # accumulation below stays f32, softmax math stays f32.
        x = x.astype(compute_dtype)
    dtype = x.dtype
    itemsize = jnp.dtype(dtype).itemsize

    # ---- tiles & sequence padding ------------------------------------------
    tq = _pow2_tile(T, 8, tq_cap)          # sublane-aligned query tile
    tkv = _pow2_tile(T, 128, tkv_cap)      # lane-aligned KV tile
    step = max(tq, tkv)                    # the smaller always divides the larger
    t_pad = -(-T // step) * step
    if t_pad != T:
        x = jnp.pad(x, ((0, 0), (0, t_pad - T), (0, 0)))

    # ---- fold 1/sqrt(hd) into the q columns of the projection ---------------
    scale_vec = jnp.concatenate(
        [jnp.full((C,), inv_scale, dtype=jnp.float32),
         jnp.ones((2 * C,), dtype=jnp.float32)])
    w_qkv_s = (w_qkv.astype(jnp.float32) * scale_vec[None, :]).astype(dtype)
    b_qkv_s = (b_qkv.astype(jnp.float32) * scale_vec).reshape(1, 3 * C).astype(dtype)

    # ---- pass 1: QKV projection (wide-N matmul, weights loaded once per ni) --
    tn_cap = max(128, min(1024, (8 << 20) // max(1, C * itemsize)))
    tn = _aligned_divisor(3 * C, 128, tn_cap)
    n_blocks = (3 * C) // tn
    proj_vmem = _clamp_vmem(2 * (tq * C + C * tn + tn + tq * tn) * itemsize)

    qkv = pl.pallas_call(
        _qkv_proj_kernel,
        out_shape=jax.ShapeDtypeStruct((B, t_pad, 3 * C), dtype),
        grid_spec=pltpu.PrefetchScalarGridSpec(
            num_scalar_prefetch=0,
            grid=(n_blocks, B, t_pad // tq),       # ni outermost: weight block
            in_specs=[                              # stays resident across (b, ti)
                pl.BlockSpec((1, tq, C), lambda ni, b, ti: (b, ti, 0)),
                pl.BlockSpec((C, tn), lambda ni, b, ti: (0, ni)),
                pl.BlockSpec((1, tn), lambda ni, b, ti: (0, ni)),
            ],
            out_specs=pl.BlockSpec((1, tq, tn), lambda ni, b, ti: (b, ti, ni)),
        ),
        compiler_params=pltpu.CompilerParams(
            dimension_semantics=("parallel", "parallel", "parallel"),
            vmem_limit_bytes=proj_vmem,
        ),
    )(x, w_qkv_s, b_qkv_s)

    # Head-major layout (cheap XLA layout transpose; keeps hd as the lane dim).
    q, k, v = jnp.split(qkv, 3, axis=-1)
    def _heads(t):
        return t.reshape(B, t_pad, H, hd).transpose(0, 2, 1, 3)   # (B, H, T, hd)
    q, k, v = _heads(q), _heads(k), _heads(v)

    wo_h = w_out.astype(dtype).reshape(H, hd, C)                  # (H, hd, C)
    bo = b_out.astype(dtype).reshape(1, C)

    # ---- pass 2: flash attention + fused output projection -------------------
    kernel = functools.partial(_flash_kernel, t_actual=T, t_padded=t_pad, tkv=tkv)

    flash_blocks = 2 * (tq * hd + 2 * tkv * hd + hd * C + C + tq * C) * itemsize
    flash_scratch = (2 * tq + tq * hd + tq * C) * 4
    flash_vmem = _clamp_vmem(flash_blocks + flash_scratch)

    out = pl.pallas_call(
        kernel,
        out_shape=jax.ShapeDtypeStruct((B, t_pad, C), dtype),
        grid_spec=pltpu.PrefetchScalarGridSpec(
            num_scalar_prefetch=0,
            grid=(B, t_pad // tq, H, t_pad // tkv),
            in_specs=[
                pl.BlockSpec((1, 1, tq, hd), lambda b, qi, h, ki: (b, h, qi, 0)),
                pl.BlockSpec((1, 1, tkv, hd), lambda b, qi, h, ki: (b, h, ki, 0)),
                pl.BlockSpec((1, 1, tkv, hd), lambda b, qi, h, ki: (b, h, ki, 0)),
                pl.BlockSpec((1, hd, C), lambda b, qi, h, ki: (h, 0, 0)),
                pl.BlockSpec((1, C), lambda b, qi, h, ki: (0, 0)),
            ],
            out_specs=pl.BlockSpec((1, tq, C), lambda b, qi, h, ki: (b, qi, 0)),
            scratch_shapes=[
                pltpu.VMEM((tq, 1), jnp.float32),    # running row max
                pltpu.VMEM((tq, 1), jnp.float32),    # running softmax denom
                pltpu.VMEM((tq, hd), jnp.float32),   # running P@V accumulator
                pltpu.VMEM((tq, C), jnp.float32),    # fused output-projection acc
            ],
        ),
        compiler_params=pltpu.CompilerParams(
            dimension_semantics=("parallel", "parallel", "arbitrary", "arbitrary"),
            vmem_limit_bytes=flash_vmem,
        ),
    )(q, k, v, wo_h, bo)

    return out[:, :T, :] if t_pad != T else out


# ---------------------------------------------------------------------------
# Pure-JAX reference (matches the PyTorch forward semantics)
# ---------------------------------------------------------------------------
def _reference(x, w_qkv, b_qkv, w_out, b_out, num_heads):
    B, T, C = x.shape
    hd = C // num_heads
    qkv = x @ w_qkv + b_qkv                                   # (B, T, 3C)
    q, k, v = jnp.split(qkv, 3, axis=-1)
    heads = lambda t: t.reshape(B, T, num_heads, hd).transpose(0, 2, 1, 3)
    q, k, v = heads(q), heads(k), heads(v)                    # (B, H, T, hd)
    scores = (q @ jnp.swapaxes(k, -2, -1)) / math.sqrt(hd)
    probs = jax.nn.softmax(scores, axis=-1)
    out = (probs @ v).transpose(0, 2, 1, 3).reshape(B, T, C)
    return out @ w_out + b_out


if __name__ == "__main__":
    # Small shapes consistent with the module: B=2, T=8, d_model=32, heads=4.
    B, T, d_model, num_heads = 2, 8, 32, 4

    key = jax.random.PRNGKey(0)
    kx, k1, k2, k3, k4 = jax.random.split(key, 5)

    x = jax.random.normal(kx, (B, T, d_model), dtype=jnp.float32)

    # Deterministic Linear-style init (uniform(-1/sqrt(fan_in), 1/sqrt(fan_in))).
    bound = 1.0 / math.sqrt(d_model)
    w_qkv = jax.random.uniform(k1, (d_model, 3 * d_model),
                               minval=-bound, maxval=bound, dtype=jnp.float32)
    b_qkv = jax.random.uniform(k2, (3 * d_model,),
                               minval=-bound, maxval=bound, dtype=jnp.float32)
    w_out = jax.random.uniform(k3, (d_model, d_model),
                               minval=-bound, maxval=bound, dtype=jnp.float32)
    b_out = jax.random.uniform(k4, (d_model,),
                               minval=-bound, maxval=bound, dtype=jnp.float32)

    mhsa = jax.jit(functools.partial(multi_head_self_attention,
                                     num_heads=num_heads))
    y = jax.block_until_ready(mhsa(x, w_qkv, b_qkv, w_out, b_out))

    y_ref = _reference(x, w_qkv, b_qkv, w_out, b_out, num_heads)
    assert y.shape == (B, T, d_model)
    assert jnp.allclose(y, y_ref, atol=1e-4, rtol=1e-4), (
        float(jnp.max(jnp.abs(y - y_ref))))

    print("KERNEL_OK")
</pallas_src>

<mosaic_0001>
module attributes {stable_mosaic.version = 11 : i64} {
  func.func @_qkv_proj_kernel(%arg0: i32, %arg1: i32, %arg2: i32, %arg3: memref<1x8x32xf32, #tpu.memory_space<vmem>>, %arg4: memref<32x96xf32, #tpu.memory_space<vmem>>, %arg5: memref<1x96xf32, #tpu.memory_space<vmem>>, %arg6: memref<1x8x96xf32, #tpu.memory_space<vmem>>) attributes {dimension_semantics = [#tpu.dimension_semantics<parallel>, #tpu.dimension_semantics<parallel>, #tpu.dimension_semantics<parallel>], iteration_bounds = array<i64: 1, 2, 16>, scalar_prefetch = 0 : i64, scratch_operands = 0 : i64, tpu.core_type = #tpu.core_type<tc>, window_params = [{transform_indices = @transform_0, window_bounds = array<i64: 1, 8, 32>}, {transform_indices = @transform_1, window_bounds = array<i64: 32, 96>}, {transform_indices = @transform_2, window_bounds = array<i64: 1, 96>}, {transform_indices = @transform_3, window_bounds = array<i64: 1, 8, 96>}]} {
    %c0 = arith.constant 0 : index
    %c0_0 = arith.constant 0 : index
    %c0_1 = arith.constant 0 : index
    %0 = vector.load %arg3[%c0, %c0_0, %c0_1] : memref<1x8x32xf32, #tpu.memory_space<vmem>>, vector<1x8x32xf32>
    %1 = vector.shape_cast %0 : vector<1x8x32xf32> to vector<8x32xf32>
    %c0_2 = arith.constant 0 : index
    %c0_3 = arith.constant 0 : index
    %2 = vector.load %arg4[%c0_2, %c0_3] : memref<32x96xf32, #tpu.memory_space<vmem>>, vector<32x96xf32>
    %cst = arith.constant dense<0.000000e+00> : vector<8x96xf32>
    %3 = tpu.matmul %1, %2, %cst {dimension_numbers = #tpu.dot_dimension_numbers<[1], [0], [0], [1], [0, 0, 1, 1], [], []>} : vector<8x32xf32>, vector<32x96xf32>, vector<8x96xf32> -> vector<8x96xf32>
    %c0_4 = arith.constant 0 : index
    %c0_5 = arith.constant 0 : index
    %4 = vector.load %arg5[%c0_4, %c0_5] : memref<1x96xf32, #tpu.memory_space<vmem>>, vector<1x96xf32>
    %5 = vector.broadcast %4 : vector<1x96xf32> to vector<8x96xf32>
    %6 = arith.addf %3, %5 : vector<8x96xf32>
    %c0_6 = arith.constant 0 : index
    %c0_7 = arith.constant 0 : index
    %c0_8 = arith.constant 0 : index
    %7 = vector.load %arg6[%c0_6, %c0_7, %c0_8] : memref<1x8x96xf32, #tpu.memory_space<vmem>>, vector<1x8x96xf32>
    %8 = vector.shape_cast %7 : vector<1x8x96xf32> to vector<8x96xf32>
    %9 = vector.shape_cast %6 : vector<8x96xf32> to vector<1x8x96xf32>
    tpu.vector_store %arg6[%c0_6, %c0_7, %c0_8], %9 {strides = array<i32>} : memref<1x8x96xf32, #tpu.memory_space<vmem>>, vector<1x8x96xf32>,
    return
  }
  func.func @transform_0(%arg0: i32, %arg1: i32, %arg2: i32) -> (i32, i32, i32) {
    %c0_i32 = arith.constant 0 : i32
    %c0_i32_0 = arith.constant 0 : i32
    return %arg1, %arg2, %c0_i32 : i32, i32, i32
  }
  func.func @transform_1(%arg0: i32, %arg1: i32, %arg2: i32) -> (i32, i32) {
    %c0_i32 = arith.constant 0 : i32
    %c0_i32_0 = arith.constant 0 : i32
    return %c0_i32, %arg0 : i32, i32
  }
  func.func @transform_2(%arg0: i32, %arg1: i32, %arg2: i32) -> (i32, i32) {
    %c0_i32 = arith.constant 0 : i32
    %c0_i32_0 = arith.constant 0 : i32
    return %c0_i32, %arg0 : i32, i32
  }
  func.func @transform_3(%arg0: i32, %arg1: i32, %arg2: i32) -> (i32, i32, i32) {
    %c0_i32 = arith.constant 0 : i32
    return %arg1, %arg2, %arg0 : i32, i32, i32
  }
}

module attributes {stable_mosaic.version = 11 : i64} {
  func.func @_flash_kernel(%arg0: i32, %arg1: i32, %arg2: i32, %arg3: i32, %arg4: memref<1x1x8x8xf32, #tpu.memory_space<vmem>>, %arg5: memref<1x1x128x8xf32, #tpu.memory_space<vmem>>, %arg6: memref<1x1x128x8xf32, #tpu.memory_space<vmem>>, %arg7: memref<1x8x32xf32, #tpu.memory_space<vmem>>, %arg8: memref<1x32xf32, #tpu.memory_space<vmem>>, %arg9: memref<1x8x32xf32, #tpu.memory_space<vmem>>, %arg10: memref<8x1xf32, #tpu.memory_space<vmem>>, %arg11: memref<8x1xf32, #tpu.memory_space<vmem>>, %arg12: memref<8x8xf32, #tpu.memory_space<vmem>>, %arg13: memref<8x32xf32, #tpu.memory_space<vmem>>) attributes {dimension_semantics = [#tpu.dimension_semantics<parallel>, #tpu.dimension_semantics<parallel>, #tpu.dimension_semantics<arbitrary>, #tpu.dimension_semantics<arbitrary>], iteration_bounds = array<i64: 2, 16, 4, 1>, scalar_prefetch = 0 : i64, scratch_operands = 4 : i64, tpu.core_type = #tpu.core_type<tc>, window_params = [{transform_indices = @transform_0, window_bounds = array<i64: 1, 1, 8, 8>}, {transform_indices = @transform_1, window_bounds = array<i64: 1, 1, 128, 8>}, {transform_indices = @transform_2, window_bounds = array<i64: 1, 1, 128, 8>}, {transform_indices = @transform_3, window_bounds = array<i64: 1, 8, 32>}, {pipeline_mode = #tpu.pipeline_mode<synchronous>, transform_indices = @transform_4, window_bounds = array<i64: 1, 32>}, {transform_indices = @transform_5, window_bounds = array<i64: 1, 8, 32>}]} {
    %c0_i32 = arith.constant 0 : i32
    %0 = arith.cmpi eq, %arg2, %c0_i32 : i32
    %c0_i32_0 = arith.constant 0 : i32
    %1 = arith.cmpi eq, %arg3, %c0_i32_0 : i32
    %2 = arith.andi %0, %1 : i1
    %3 = arith.extui %2 : i1 to i32
    %c0_i32_1 = arith.constant 0 : i32
    %4 = arith.cmpi ne, %3, %c0_i32_1 : i32
    scf.if %4 {
      %cst_35 = arith.constant 0.000000e+00 : f32
      %53 = vector.broadcast %cst_35 : f32 to vector<8x32xf32>
      %c0_36 = arith.constant 0 : index
      %c0_37 = arith.constant 0 : index
      %54 = vector.load %arg13[%c0_36, %c0_37] : memref<8x32xf32, #tpu.memory_space<vmem>>, vector<8x32xf32>
      tpu.vector_store %arg13[%c0_36, %c0_37], %53 {strides = array<i32>} : memref<8x32xf32, #tpu.memory_space<vmem>>, vector<8x32xf32>,
    } else {
    }
    %c0_i32_2 = arith.constant 0 : i32
    %5 = arith.cmpi eq, %arg3, %c0_i32_2 : i32
    %6 = arith.extui %5 : i1 to i32
    %c0_i32_3 = arith.constant 0 : i32
    %7 = arith.cmpi ne, %6, %c0_i32_3 : i32
    scf.if %7 {
      %cst_35 = arith.constant 0xFF800000 : f32
      %53 = vector.broadcast %cst_35 : f32 to vector<8x1xf32>
      %c0_36 = arith.constant 0 : index
      %c0_37 = arith.constant 0 : index
      %54 = vector.load %arg10[%c0_36, %c0_37] : memref<8x1xf32, #tpu.memory_space<vmem>>, vector<8x1xf32>
      tpu.vector_store %arg10[%c0_36, %c0_37], %53 {strides = array<i32>} : memref<8x1xf32, #tpu.memory_space<vmem>>, vector<8x1xf32>,
      %cst_38 = arith.constant 0.000000e+00 : f32
      %55 = vector.broadcast %cst_38 : f32 to vector<8x1xf32>
      %c0_39 = arith.constant 0 : index
      %c0_40 = arith.constant 0 : index
      %56 = vector.load %arg11[%c0_39, %c0_40] : memref<8x1xf32, #tpu.memory_space<vmem>>, vector<8x1xf32>
      tpu.vector_store %arg11[%c0_39, %c0_40], %55 {strides = array<i32>} : memref<8x1xf32, #tpu.memory_space<vmem>>, vector<8x1xf32>,
      %cst_41 = arith.constant 0.000000e+00 : f32
      %57 = vector.broadcast %cst_41 : f32 to vector<8x8xf32>
      %c0_42 = arith.constant 0 : index
      %c0_43 = arith.constant 0 : index
      %58 = vector.load %arg12[%c0_42, %c0_43] : memref<8x8xf32, #tpu.memory_space<vmem>>, vector<8x8xf32>
      tpu.vector_store %arg12[%c0_42, %c0_43], %57 {strides = array<i32>} : memref<8x8xf32, #tpu.memory_space<vmem>>, vector<8x8xf32>,
    } else {
    }
    %c0 = arith.constant 0 : index
    %c0_4 = arith.constant 0 : index
    %c0_5 = arith.constant 0 : index
    %c0_6 = arith.constant 0 : index
    %8 = vector.load %arg4[%c0, %c0_4, %c0_5, %c0_6] : memref<1x1x8x8xf32, #tpu.memory_space<vmem>>, vector<1x1x8x8xf32>
    %9 = vector.shape_cast %8 : vector<1x1x8x8xf32> to vector<8x8xf32>
    %c0_7 = arith.constant 0 : index
    %c0_8 = arith.constant 0 : index
    %c0_9 = arith.constant 0 : index
    %c0_10 = arith.constant 0 : index
    %10 = vector.load %arg5[%c0_7, %c0_8, %c0_9, %c0_10] : memref<1x1x128x8xf32, #tpu.memory_space<vmem>>, vector<1x1x128x8xf32>
    %11 = vector.shape_cast %10 : vector<1x1x128x8xf32> to vector<128x8xf32>
    %c0_11 = arith.constant 0 : index
    %c0_12 = arith.constant 0 : index
    %c0_13 = arith.constant 0 : index
    %c0_14 = arith.constant 0 : index
    %12 = vector.load %arg6[%c0_11, %c0_12, %c0_13, %c0_14] : memref<1x1x128x8xf32, #tpu.memory_space<vmem>>, vector<1x1x128x8xf32>
    %13 = vector.shape_cast %12 : vector<1x1x128x8xf32> to vector<128x8xf32>
    %cst = arith.constant dense<0.000000e+00> : vector<8x128xf32>
    %14 = tpu.matmul %9, %11, %cst {dimension_numbers = #tpu.dot_dimension_numbers<[1], [1], [0], [0], [0, 0, 1, 0], [], []>} : vector<8x8xf32>, vector<128x8xf32>, vector<8x128xf32> -> vector<8x128xf32>
    %c128_i32 = arith.constant 128 : i32
    %15 = arith.muli %arg3, %c128_i32 : i32
    %16 = tpu.iota {dimensions = array<i32: 1>} : vector<8x128xi32>
    %17 = vector.broadcast %15 : i32 to vector<8x128xi32>
    %18 = arith.addi %17, %16 : vector<8x128xi32>
    %c8_i32 = arith.constant 8 : i32
    %19 = vector.broadcast %c8_i32 : i32 to vector<8x128xi32>
    %20 = arith.cmpi slt, %18, %19 : vector<8x128xi32>
    %cst_15 = arith.constant -1.000000e+30 : f32
    %21 = vector.broadcast %cst_15 : f32 to vector<8x128xf32>
    %22 = arith.select %20, %14, %21 : vector<8x128xi1>, vector<8x128xf32>
    %c0_16 = arith.constant 0 : index
    %c0_17 = arith.constant 0 : index
    %23 = vector.load %arg10[%c0_16, %c0_17] : memref<8x1xf32, #tpu.memory_space<vmem>>, vector<8x1xf32>
    %cst_18 = arith.constant dense<0xFF800000> : vector<8xf32>
    %24 = vector.multi_reduction <maximumf>, %22, %cst_18 [1] : vector<8x128xf32> to vector<8xf32>
    %25 = vector.shape_cast %24 : vector<8xf32> to vector<8x1xf32>
    %26 = arith.maximumf %23, %25 : vector<8x1xf32>
    %27 = arith.subf %23, %26 : vector<8x1xf32>
    %28 = math.exp %27 : vector<8x1xf32>
    %29 = vector.broadcast %26 : vector<8x1xf32> to vector<8x128xf32>
    %30 = arith.subf %22, %29 : vector<8x128xf32>
    %31 = math.exp %30 : vector<8x128xf32>
    %c0_19 = arith.constant 0 : index
    %c0_20 = arith.constant 0 : index
    %32 = vector.load %arg11[%c0_19, %c0_20] : memref<8x1xf32, #tpu.memory_space<vmem>>, vector<8x1xf32>
    %33 = arith.mulf %28, %32 : vector<8x1xf32>
    %cst_21 = arith.constant dense<0.000000e+00> : vector<8xf32>
    %34 = vector.multi_reduction <add>, %31, %cst_21 [1] : vector<8x128xf32> to vector<8xf32>
    %35 = vector.shape_cast %34 : vector<8xf32> to vector<8x1xf32>
    %36 = arith.addf %33, %35 : vector<8x1xf32>
    %c0_22 = arith.constant 0 : index
    %c0_23 = arith.constant 0 : index
    %37 = vector.load %arg11[%c0_22, %c0_23] : memref<8x1xf32, #tpu.memory_space<vmem>>, vector<8x1xf32>
    tpu.vector_store %arg11[%c0_22, %c0_23], %36 {strides = array<i32>} : memref<8x1xf32, #tpu.memory_space<vmem>>, vector<8x1xf32>,
    %c0_24 = arith.constant 0 : index
    %c0_25 = arith.constant 0 : index
    %38 = vector.load %arg12[%c0_24, %c0_25] : memref<8x8xf32, #tpu.memory_space<vmem>>, vector<8x8xf32>
    %39 = vector.broadcast %28 : vector<8x1xf32> to vector<8x8xf32>
    %40 = arith.mulf %39, %38 : vector<8x8xf32>
    %cst_26 = arith.constant dense<0.000000e+00> : vector<8x8xf32>
    %41 = tpu.matmul %31, %13, %cst_26 {dimension_numbers = #tpu.dot_dimension_numbers<[1], [0], [0], [1], [0, 0, 1, 1], [], []>} : vector<8x128xf32>, vector<128x8xf32>, vector<8x8xf32> -> vector<8x8xf32>
    %42 = arith.addf %40, %41 : vector<8x8xf32>
    %c0_27 = arith.constant 0 : index
    %c0_28 = arith.constant 0 : index
    %43 = vector.load %arg12[%c0_27, %c0_28] : memref<8x8xf32, #tpu.memory_space<vmem>>, vector<8x8xf32>
    tpu.vector_store %arg12[%c0_27, %c0_28], %42 {strides = array<i32>} : memref<8x8xf32, #tpu.memory_space<vmem>>, vector<8x8xf32>,
    %c0_29 = arith.constant 0 : index
    %c0_30 = arith.constant 0 : index
    %44 = vector.load %arg10[%c0_29, %c0_30] : memref<8x1xf32, #tpu.memory_space<vmem>>, vector<8x1xf32>
    tpu.vector_store %arg10[%c0_29, %c0_30], %26 {strides = array<i32>} : memref<8x1xf32, #tpu.memory_space<vmem>>, vector<8x1xf32>,
    %c0_i32_31 = arith.constant 0 : i32
    %45 = arith.cmpi eq, %arg3, %c0_i32_31 : i32
    %46 = arith.extui %45 : i1 to i32
    %c0_i32_32 = arith.constant 0 : i32
    %47 = arith.cmpi ne, %46, %c0_i32_32 : i32
    scf.if %47 {
      %c0_35 = arith.constant 0 : index
      %c0_36 = arith.constant 0 : index
      %53 = vector.load %arg12[%c0_35, %c0_36] : memref<8x8xf32, #tpu.memory_space<vmem>>, vector<8x8xf32>
      %c0_37 = arith.constant 0 : index
      %c0_38 = arith.constant 0 : index
      %54 = vector.load %arg11[%c0_37, %c0_38] : memref<8x1xf32, #tpu.memory_space<vmem>>, vector<8x1xf32>
      %55 = tpu.reciprocal %54 : vector<8x1xf32> -> vector<8x1xf32>
      %56 = vector.broadcast %55 : vector<8x1xf32> to vector<8x8xf32>
      %57 = arith.mulf %53, %56 : vector<8x8xf32>
      %c0_39 = arith.constant 0 : index
      %c0_40 = arith.constant 0 : index
      %58 = vector.load %arg13[%c0_39, %c0_40] : memref<8x32xf32, #tpu.memory_space<vmem>>, vector<8x32xf32>
      %c0_41 = arith.constant 0 : index
      %c0_42 = arith.constant 0 : index
      %c0_43 = arith.constant 0 : index
      %59 = vector.load %arg7[%c0_41, %c0_42, %c0_43] : memref<1x8x32xf32, #tpu.memory_space<vmem>>, vector<1x8x32xf32>
      %60 = vector.shape_cast %59 : vector<1x8x32xf32> to vector<8x32xf32>
      %cst_44 = arith.constant dense<0.000000e+00> : vector<8x32xf32>
      %61 = tpu.matmul %57, %60, %cst_44 {dimension_numbers = #tpu.dot_dimension_numbers<[1], [0], [0], [1], [0, 0, 1, 1], [], []>} : vector<8x8xf32>, vector<8x32xf32>, vector<8x32xf32> -> vector<8x32xf32>
      %62 = arith.addf %58, %61 : vector<8x32xf32>
      %c0_45 = arith.constant 0 : index
      %c0_46 = arith.constant 0 : index
      %63 = vector.load %arg13[%c0_45, %c0_46] : memref<8x32xf32, #tpu.memory_space<vmem>>, vector<8x32xf32>
      tpu.vector_store %arg13[%c0_45, %c0_46], %62 {strides = array<i32>} : memref<8x32xf32, #tpu.memory_space<vmem>>, vector<8x32xf32>,
    } else {
    }
    %c3_i32 = arith.constant 3 : i32
    %48 = arith.cmpi eq, %arg2, %c3_i32 : i32
    %c0_i32_33 = arith.constant 0 : i32
    %49 = arith.cmpi eq, %arg3, %c0_i32_33 : i32
    %50 = arith.andi %48, %49 : i1
    %51 = arith.extui %50 : i1 to i32
    %c0_i32_34 = arith.constant 0 : i32
    %52 = arith.cmpi ne, %51, %c0_i32_34 : i32
    scf.if %52 {
      %c0_35 = arith.constant 0 : index
      %c0_36 = arith.constant 0 : index
      %53 = vector.load %arg13[%c0_35, %c0_36] : memref<8x32xf32, #tpu.memory_space<vmem>>, vector<8x32xf32>
      %c0_37 = arith.constant 0 : index
      %c0_38 = arith.constant 0 : index
      %54 = vector.load %arg8[%c0_37, %c0_38] : memref<1x32xf32, #tpu.memory_space<vmem>>, vector<1x32xf32>
      %55 = vector.broadcast %54 : vector<1x32xf32> to vector<8x32xf32>
      %56 = arith.addf %53, %55 : vector<8x32xf32>
      %c0_39 = arith.constant 0 : index
      %c0_40 = arith.constant 0 : index
      %c0_41 = arith.constant 0 : index
      %57 = vector.load %arg9[%c0_39, %c0_40, %c0_41] : memref<1x8x32xf32, #tpu.memory_space<vmem>>, vector<1x8x32xf32>
      %58 = vector.shape_cast %57 : vector<1x8x32xf32> to vector<8x32xf32>
      %59 = vector.shape_cast %56 : vector<8x32xf32> to vector<1x8x32xf32>
      tpu.vector_store %arg9[%c0_39, %c0_40, %c0_41], %59 {strides = array<i32>} : memref<1x8x32xf32, #tpu.memory_space<vmem>>, vector<1x8x32xf32>,
    } else {
    }
    return
  }
  func.func @transform_0(%arg0: i32, %arg1: i32, %arg2: i32, %arg3: i32) -> (i32, i32, i32, i32) {
    %c0_i32 = arith.constant 0 : i32
    %c0_i32_0 = arith.constant 0 : i32
    return %arg0, %arg2, %arg1, %c0_i32 : i32, i32, i32, i32
  }
  func.func @transform_1(%arg0: i32, %arg1: i32, %arg2: i32, %arg3: i32) -> (i32, i32, i32, i32) {
    %c0_i32 = arith.constant 0 : i32
    %c0_i32_0 = arith.constant 0 : i32
    return %arg0, %arg2, %arg3, %c0_i32 : i32, i32, i32, i32
  }
  func.func @transform_2(%arg0: i32, %arg1: i32, %arg2: i32, %arg3: i32) -> (i32, i32, i32, i32) {
    %c0_i32 = arith.constant 0 : i32
    %c0_i32_0 = arith.constant 0 : i32
    return %arg0, %arg2, %arg3, %c0_i32 : i32, i32, i32, i32
  }
  func.func @transform_3(%arg0: i32, %arg1: i32, %arg2: i32, %arg3: i32) -> (i32, i32, i32) {
    %c0_i32 = arith.constant 0 : i32
    %c0_i32_0 = arith.constant 0 : i32
    %c0_i32_1 = arith.constant 0 : i32
    return %arg2, %c0_i32, %c0_i32_0 : i32, i32, i32
  }
  func.func @transform_4(%arg0: i32, %arg1: i32, %arg2: i32, %arg3: i32) -> (i32, i32) {
    %c0_i32 = arith.constant 0 : i32
    %c0_i32_0 = arith.constant 0 : i32
    %c0_i32_1 = arith.constant 0 : i32
    return %c0_i32, %c0_i32_0 : i32, i32
  }
  func.func @transform_5(%arg0: i32, %arg1: i32, %arg2: i32, %arg3: i32) -> (i32, i32, i32) {
    %c0_i32 = arith.constant 0 : i32
    %c0_i32_0 = arith.constant 0 : i32
    return %arg0, %arg1, %c0_i32 : i32, i32, i32
  }
}

</mosaic_0001>

<llo_original>
// kernel: multi_head_self_attention.2
$region0: #{multi_head_self_attention.2}
  #allocation0 [shape = 'u32[]', space=smem, size = 0x4, offset = 0x4, fixed_abs, tag = 'smem constant byte address 0x4 - core index']
  #allocation1 [shape = 'u32[144,128]{1,0:T(1,128)}', space=vmem, size = 0x12000, scoped, tag = 'internal scratch']
  %s0 = inlined_call_operand.vmem [shape: f32[2,128,32], index: 0, kind: input, shape index: {}]
  %s1 = inlined_call_operand.vmem [shape: f32[32,96], index: 1, kind: input, shape index: {}]
  %s2 = inlined_call_operand.vmem [shape: f32[1,96], index: 2, kind: input, shape index: {}]
  %s3 = inlined_call_operand.vmem [shape: f32[2,128,96], index: 3, kind: output, shape index: {}]
  %s4 = sld [smem:[#allocation0]]
  $region45: #{multi_head_self_attention.2} parent=0
    _
  %s6 = ssub.s32 1, %s4
  %s7 = scalar_select 0, %s6, %s4
  loop: start=0, step=1, limit=34
  $region2: #{multi_head_self_attention.2} parent=0 // loop_pre_header
    _
  $region3: #{multi_head_self_attention.2} parent=0 // loop_header
    %s9 = sphi 0, %s13
    %p10 = scmp.ge.s32.totalorder %s9, 34
    %s16 = sphi 0, %s35
    %s17 = sphi 0, %s31
    %s18 = sphi 0, %s27
    %s19 = sphi 0, %s16
    %s20 = sphi 0, %s17
    %s21 = sphi 0, %s18
    %s22 = sphi 0, %s19
    %s23 = sphi 0, %s20
    %s24 = sphi 0, %s21
    %s40 = sphi 0, %s42
    %s43 = sphi 0, %s40
    %s44 = sphi 0, %s43
    %s60 = sphi 0, %s44
    %s66 = sphi 0, %s68
    %s69 = sphi 0, %s66
    %s70 = sphi 0, %s69
    %s86 = sphi 0, %s70
    %s92 = sphi 0, %s94
    %s95 = sphi 0, %s92
    %s96 = sphi 0, %s95
    %s112 = sphi 0, %s96
    %s122 = sphi 0, %s124
    %s125 = sphi 0, %s122
    %s126 = sphi 0, %s125
    %s142 = sphi 0, %s126
  $region4: #{multi_head_self_attention.2} parent=0 // loop_header_branch
    %12 = sbr.rel (%p10) target = $region8
  $region5: #{multi_head_self_attention.2} parent=0 // loop_body
    %s14 = ssub.s32 %s9, 1
    %s15 = ssub.s32 %s9, 2
    %s25 = sadd.s32 1, %s18
    %p26 = scmp.ge.s32.totalorder %s25, 16
    %s27 = scalar_select %p26, 0, %s25
    %s28 = sadd.s32 1, %s17
    %s29 = scalar_select %p26, %s28, %s17
    %p30 = scmp.ge.s32.totalorder %s29, 2
    %s31 = scalar_select %p30, 0, %s29
    %s32 = sadd.s32 1, %s16
    %s33 = scalar_select %p30, %s32, %s16
    %p34 = scmp.ge.s32.totalorder %s33, 1
    %s35 = scalar_select %p34, 0, %s33
    %s36 = ssub.s32 %s17, %s31
    %s37 = ssub.s32 %s18, %s27
    %s38 = sor.u32 %s36, %s37
    %p39 = scmp.eq.s32.totalorder %s38, 0
    %s41 = sadd.s32 %s40, 1
    %s42 = scalar_select %p39, %s40, %s41
    %p45 = pneg %p39
    %p46 = scmp.eq.s32.totalorder %s9, 31
    %p47 = por %p45, %p46
    %p48 = scmp.ne.s32.totalorder %s40, %s43
    %p49 = scmp.eq.s32.totalorder %s9, 0
    %p50 = por %p48, %p49
    %p51 = scmp.ne.s32.totalorder %s40, %s43
    %p52 = scmp.eq.s32.totalorder %s14, 31
    %p53 = por %p51, %p52
    %p54 = scmp.ne.s32.totalorder %s43, %s44
    %p55 = scmp.eq.s32.totalorder %s14, 0
    %p56 = por %p54, %p55
    %p57 = scmp.ne.s32.totalorder %s43, %s44
    %p58 = scmp.eq.s32.totalorder %s15, 31
    %p59 = por %p57, %p58
    %p61 = scmp.ne.s32.totalorder %s44, %s60
    %p62 = scmp.eq.s32.totalorder %s15, 0
    %p63 = por %p61, %p62
    %s64 = ssub.s32 %s16, %s35
    %p65 = scmp.eq.s32.totalorder %s64, 0
    %s67 = sadd.s32 %s66, 1
    %s68 = scalar_select %p65, %s66, %s67
    %p71 = pneg %p65
    %p72 = scmp.eq.s32.totalorder %s9, 31
    %p73 = por %p71, %p72
    %p74 = scmp.ne.s32.totalorder %s66, %s69
    %p75 = scmp.eq.s32.totalorder %s9, 0
    %p76 = por %p74, %p75
    %p77 = scmp.ne.s32.totalorder %s66, %s69
    %p78 = scmp.eq.s32.totalorder %s14, 31
    %p79 = por %p77, %p78
    %p80 = scmp.ne.s32.totalorder %s69, %s70
    %p81 = scmp.eq.s32.totalorder %s14, 0
    %p82 = por %p80, %p81
    %p83 = scmp.ne.s32.totalorder %s69, %s70
    %p84 = scmp.eq.s32.totalorder %s15, 31
    %p85 = por %p83, %p84
    %p87 = scmp.ne.s32.totalorder %s70, %s86
    %p88 = scmp.eq.s32.totalorder %s15, 0
    %p89 = por %p87, %p88
    %s90 = ssub.s32 %s16, %s35
    %p91 = scmp.eq.s32.totalorder %s90, 0
    %s93 = sadd.s32 %s92, 1
    %s94 = scalar_select %p91, %s92, %s93
    %p97 = pneg %p91
    %p98 = scmp.eq.s32.totalorder %s9, 31
    %p99 = por %p97, %p98
    %p100 = scmp.ne.s32.totalorder %s92, %s95
    %p101 = scmp.eq.s32.totalorder %s9, 0
    %p102 = por %p100, %p101
    %p103 = scmp.ne.s32.totalorder %s92, %s95
    %p104 = scmp.eq.s32.totalorder %s14, 31
    %p105 = por %p103, %p104
    %p106 = scmp.ne.s32.totalorder %s95, %s96
    %p107 = scmp.eq.s32.totalorder %s14, 0
    %p108 = por %p106, %p107
    %p109 = scmp.ne.s32.totalorder %s95, %s96
    %p110 = scmp.eq.s32.totalorder %s15, 31
    %p111 = por %p109, %p110
    %p113 = scmp.ne.s32.totalorder %s96, %s112
    %p114 = scmp.eq.s32.totalorder %s15, 0
    %p115 = por %p113, %p114
    %s116 = ssub.s32 %s17, %s31
    %s117 = ssub.s32 %s18, %s27
    %s118 = sor.u32 %s116, %s117
    %s119 = ssub.s32 %s16, %s35
    %s120 = sor.u32 %s118, %s119
    %p121 = scmp.eq.s32.totalorder %s120, 0
    %s123 = sadd.s32 %s122, 1
    %s124 = scalar_select %p121, %s122, %s123
    %p127 = pneg %p121
    %p128 = scmp.eq.s32.totalorder %s9, 31
    %p129 = por %p127, %p128
    %p130 = scmp.ne.s32.totalorder %s122, %s125
    %p131 = scmp.eq.s32.totalorder %s9, 0
    %p132 = por %p130, %p131
    %p133 = scmp.ne.s32.totalorder %s122, %s125
    %p134 = scmp.eq.s32.totalorder %s14, 31
    %p135 = por %p133, %p134
    %p136 = scmp.ne.s32.totalorder %s125, %s126
    %p137 = scmp.eq.s32.totalorder %s14, 0
    %p138 = por %p136, %p137
    %p139 = scmp.ne.s32.totalorder %s125, %s126
    %p140 = scmp.eq.s32.totalorder %s15, 31
    %p141 = por %p139, %p140
    %p143 = scmp.ne.s32.totalorder %s126, %s142
    %p144 = scmp.eq.s32.totalorder %s15, 0
    %p145 = por %p143, %p144
    %p146 = scmp.le.s32.totalorder 1, %s9
    %p147 = scmp.lt.s32.totalorder %s9, 33
    %p148 = pnand %p146, %p147
    %p149 = pneg %p148
    // Predicated region
    $region9: #{multi_head_self_attention.2} parent=5 // pred_check
      _
    $region10: #{multi_head_self_attention.2} parent=5 // pred_check_branch
      %151 = sbr.rel (%p148) target = $region12
    $region11: #{multi_head_self_attention.2} parent=5 // pred_region
      %s152 = ssub.s32 %s9, 1
      // Predicated region
      $region13: #{multi_head_self_attention.2} parent=11 // pred_check
        %p153 = pneg %p82
      $region14: #{multi_head_self_attention.2} parent=11 // pred_check_branch
        %155 = sbr.rel (%p153) target = $region16
      $region15: #{multi_head_self_attention.2} parent=11 // pred_region
        %p156 = scmp.lt.s32.totalorder %s19, 0
        %s157 = scalar_select %p156, %s19, 0
        %s158 = smul.addr %s157, 8
        %s159 = scalar_lea.vmem %s1, %s158
      $region16: #{multi_head_self_attention.2} parent=11 // pred_fallthru
        _
      // Predicated region
      $region17: #{multi_head_self_attention.2} parent=11 // pred_check
        %p160 = pneg %p108
      $region18: #{multi_head_self_attention.2} parent=11 // pred_check_branch
        %162 = sbr.rel (%p160) target = $region20
      $region19: #{multi_head_self_attention.2} parent=11 // pred_region
        %p163 = scmp.lt.s32.totalorder %s19, 0
        %s164 = scalar_select %p163, %s19, 0
        %s165 = scalar_lea.vmem %s2, %s164
      $region20: #{multi_head_self_attention.2} parent=11 // pred_fallthru
        _
    $region12: #{multi_head_self_attention.2} parent=5 // pred_fallthru
      _
    %p166 = scmp.lt.s32.totalorder %s9, 32
    // Predicated region
    $region21: #{multi_head_self_attention.2} parent=5 // pred_check
      %p167 = pneg %p166
    $region22: #{multi_head_self_attention.2} parent=5 // pred_check_branch
      %169 = sbr.rel (%p167) target = $region24
    $region23: #{multi_head_self_attention.2} parent=5 // pred_region
      // Predicated region
      $region25: #{multi_head_self_attention.2} parent=23 // pred_check
        %p170 = pneg %p50
      $region26: #{multi_head_self_attention.2} parent=23 // pred_check_branch
        %172 = sbr.rel (%p170) target = $region28
      $region27: #{multi_head_self_attention.2} parent=23 // pred_region
        %p173 = scmp.lt.s32.totalorder %s17, 1
        %s174 = scalar_select %p173, %s17, 1
        %p175 = scmp.lt.s32.totalorder %s18, 15
        %s176 = scalar_select %p175, %s18, 15
        %s177 = smul.addr %s174, 16
        %s178 = sadd.s32 %s176, %s177
        %s179 = smul.addr %s178, 8
        %s180 = scalar_lea.vmem %s0, %s179
      $region28: #{multi_head_self_attention.2} parent=23 // pred_fallthru
        _
    $region24: #{multi_head_self_attention.2} parent=5 // pred_fallthru
      _
    %p181 = scmp.le.s32.totalorder 1, %s9
    %p182 = scmp.lt.s32.totalorder %s9, 33
    %p183 = pnand %p181, %p182
    %p184 = pneg %p183
    // Predicated region
    $region29: #{multi_head_self_attention.2} parent=5 // pred_check
      _
    $region30: #{multi_head_self_attention.2} parent=5 // pred_check_branch
      %186 = sbr.rel (%p183) target = $region32
    $region31: #{multi_head_self_attention.2} parent=5 // pred_region
      %s187 = ssub.s32 %s9, 1
      %p188 = scmp.lt.s32.totalorder %s20, 1
      %s189 = scalar_select %p188, %s20, 1
      %p190 = scmp.lt.s32.totalorder %s21, 15
      %s191 = scalar_select %p190, %s21, 15
      %s192 = smul.addr %s189, 16
      %s193 = sadd.s32 %s191, %s192
      %s194 = smul.addr %s193, 8
      %s195 = scalar_lea.vmem %s0, %s194
      %p196 = pneg %p56
      %p197 = pneg %p53
      %p198 = scmp.lt.s32.totalorder %s19, 0
      %s199 = scalar_select %p198, %s19, 0
      %s200 = smul.addr %s199, 8
      %s201 = scalar_lea.vmem %s1, %s200
      %p202 = pneg %p82
      %p203 = pneg %p79
      %p204 = scmp.lt.s32.totalorder %s19, 0
      %s205 = scalar_select %p204, %s19, 0
      %s206 = scalar_lea.vmem %s2, %s205
      %p207 = pneg %p108
      %p208 = pneg %p105
      %p209 = pneg %p138
      %p210 = pneg %p135
      %p211 = scmp.lt.s32.totalorder %s20, 1
      %s212 = scalar_select %p211, %s20, 1
      %p213 = scmp.lt.s32.totalorder %s21, 15
      %s214 = scalar_select %p213, %s21, 15
      %p215 = scmp.lt.s32.totalorder %s19, 0
      %s216 = scalar_select %p215, %s19, 0
      %s217 = sadd.s32 %s216, %s214
      %s218 = smul.addr %s212, 16
      %s219 = sadd.s32 %s217, %s218
      %s220 = smul.addr %s219, 8
      %s221 = scalar_lea.vmem %s3, %s220
      %p222 = scmp.lt.s32.totalorder %s20, 1
      %s223 = scalar_select %p222, %s20, 1
      %p224 = scmp.lt.s32.totalorder %s21, 15
      %s225 = scalar_select %p224, %s21, 15
      %s226 = smul.addr %s223, 16
      %s227 = sadd.s32 %s225, %s226
      %s228 = smul.addr %s227, 8
      %s229 = scalar_lea.vmem %s0, %s228
      %p230 = scmp.lt.s32.totalorder %s19, 0
      %s231 = scalar_select %p230, %s19, 0
      %s232 = smul.addr %s231, 8
      %s233 = scalar_lea.vmem %s1, %s232
      %p234 = scmp.lt.s32.totalorder %s19, 0
      %s235 = scalar_select %p234, %s19, 0
      %s236 = scalar_lea.vmem %s2, %s235
      %p237 = scmp.lt.s32.totalorder %s20, 1
      %s238 = scalar_select %p237, %s20, 1
      %p239 = scmp.lt.s32.totalorder %s21, 15
      %s240 = scalar_select %p239, %s21, 15
      %p241 = scmp.lt.s32.totalorder %s19, 0
      %s242 = scalar_select %p241, %s19, 0
      %s243 = sadd.s32 %s242, %s240
      %s244 = smul.addr %s238, 16
      %s245 = sadd.s32 %s243, %s244
      %s246 = smul.addr %s245, 8
      %s247 = scalar_lea.vmem %s3, %s246
      %v248 = vld [vmem:[%s229] sm:$0xff]
      %v249 = vld [vmem:[%s233] sm:$0xff]
      %v250 = vld [vmem:[%s233 + $0x8] sm:$0xff]
      %v251 = vld [vmem:[%s233 + $0x10] sm:$0xff]
      %v252 = vld [vmem:[%s233 + $0x18] sm:$0xff]
      %v253 = vld [vmem:[%s236] sm:$0x1]
      %v255 = vlaneseq
      %v256 = vshrl.u32 %v255, 7
      %v257 = vsub.s32 0, %v256
      %v258 = vrot.slane %v253, %v257
      %vm260 = vcmask 261120
      %v262 = vsel %vm260, %v248, 0
      %264 = vmatprep.subr.mxu0 0.0
      %265 = vmatpush1.msra.mxu0 0.0
      %266 = vmatprep.subr.mxu0 0.0
      %267 = vmatpush1.msra.mxu0 0.0
      %268 = vmatprep.subr.mxu0 0.0
      %269 = vmatpush1.msra.mxu0 0.0
      %270 = vmatprep.subr.mxu0 0.0
      %271 = vmatpush1.msra.mxu0 0.0
      %272 = vmatprep.subr.mxu0 0.0
      %273 = vmatpush1.msra.mxu0 0.0
      %274 = vmatprep.subr.mxu0 0.0
      %275 = vmatpush1.msra.mxu0 0.0
      %276 = vmatprep.subr.mxu0 0.0
      %277 = vmatpush1.msra.mxu0 0.0
      %278 = vmatprep.subr.mxu0 0.0
      %279 = vmatpush1.msra.mxu0 0.0
      %280 = vmatprep.subr.mxu0 0.0
      %281 = vmatpush1.msra.mxu0 0.0
      %282 = vmatprep.subr.mxu0 0.0
      %283 = vmatpush1.msra.mxu0 0.0
      %284 = vmatprep.subr.mxu0 0.0
      %285 = vmatpush1.msra.mxu0 0.0
      %286 = vmatprep.subr.mxu0 0.0
      %287 = vmatpush1.msra.mxu0 0.0
      %288 = vmatprep.subr.mxu0 0.0
      %289 = vmatpush1.msra.mxu0 %v252
      %290 = vmatprep.subr.mxu0 0.0
      %291 = vmatpush1.msra.mxu0 %v251
      %292 = vmatprep.subr.mxu0 0.0
      %293 = vmatpush1.msra.mxu0 %v250
      %294 = vmatprep.subr.mxu0 0.0
      %295 = vmatpush1.msra.mxu0 %v249
      %296 = vmatprep.subr.mxu0 0.0
      %297 = vmatpush2.msra.mxu0 0.0
      %298 = vmatprep.subr.mxu0 0.0
      %299 = vmatpush2.msra.mxu0 0.0
      %300 = vmatprep.subr.mxu0 0.0
      %301 = vmatpush2.msra.mxu0 0.0
      %302 = vmatprep.subr.mxu0 0.0
      %303 = vmatpush2.msra.mxu0 0.0
      %304 = vmatprep.subr.mxu0 0.0
      %305 = vmatpush2.msra.mxu0 0.0
      %306 = vmatprep.subr.mxu0 0.0
      %307 = vmatpush2.msra.mxu0 0.0
      %308 = vmatprep.subr.mxu0 0.0
      %309 = vmatpush2.msra.mxu0 0.0
      %310 = vmatprep.subr.mxu0 0.0
      %311 = vmatpush2.msra.mxu0 0.0
      %312 = vmatprep.subr.mxu0 0.0
      %313 = vmatpush2.msra.mxu0 0.0
      %314 = vmatprep.subr.mxu0 0.0
      %315 = vmatpush2.msra.mxu0 0.0
      %316 = vmatprep.subr.mxu0 0.0
      %317 = vmatpush2.msra.mxu0 0.0
      %318 = vmatprep.subr.mxu0 0.0
      %319 = vmatpush2.msra.mxu0 0.0
      %320 = vmatprep.subr.mxu0 0.0
      %321 = vmatpush2.msra.mxu0 0.0
      %322 = vmatprep.subr.mxu0 0.0
      %323 = vmatpush2.msra.mxu0 0.0
      %324 = vmatprep.subr.mxu0 0.0
      %325 = vmatpush2.msra.mxu0 0.0
      %326 = vmatprep.subr.mxu0 0.0
      %327 = vmatpush2.msra.mxu0 0.0
      %328 = vmatprep.mubr.f32.mxu0 0.0
      %329 = vmatmul.mubr.f32.gmra.mxu0 %v262
      %v330 = vpop.f32.mrf.mxu0
      %v331 = vadd.f32 %v258, %v330
      %v332 = vpop.f32.mrf.mxu0
      %333 = vdwg.mxu0
      %vm334 = vcmask 785408
      %335 = vst.msk [vmem:[%s247] sm:$0xff] %vm334, %v331
      %p336 = scmp.lt.s32.totalorder %s20, 1
      %s337 = scalar_select %p336, %s20, 1
      %p338 = scmp.lt.s32.totalorder %s21, 15
      %s339 = scalar_select %p338, %s21, 15
      %p340 = scmp.lt.s32.totalorder %s19, 0
      %s341 = scalar_select %p340, %s19, 0
      %s342 = sadd.s32 %s341, %s339
      %s343 = smul.addr %s337, 16
      %s344 = sadd.s32 %s342, %s343
      %s345 = smul.addr %s344, 8
      %s346 = scalar_lea.vmem %s3, %s345
      // Predicated region
      $region33: #{multi_head_self_attention.2} parent=31 // pred_check
        %p347 = pneg %p135
      $region34: #{multi_head_self_attention.2} parent=31 // pred_check_branch
        %349 = sbr.rel (%p347) target = $region36
      $region35: #{multi_head_self_attention.2} parent=31 // pred_region
        _
      $region36: #{multi_head_self_attention.2} parent=31 // pred_fallthru
        _
    $region32: #{multi_head_self_attention.2} parent=5 // pred_fallthru
      _
    %p350 = scmp.le.s32.totalorder 2, %s9
    // Predicated region
    $region37: #{multi_head_self_attention.2} parent=5 // pred_check
      %p351 = pneg %p350
    $region38: #{multi_head_self_attention.2} parent=5 // pred_check_branch
      %353 = sbr.rel (%p351) target = $region40
    $region39: #{multi_head_self_attention.2} parent=5 // pred_region
      %s354 = ssub.s32 %s9, 2
      // Predicated region
      $region41: #{multi_head_self_attention.2} parent=39 // pred_check
        %p355 = pneg %p141
      $region42: #{multi_head_self_attention.2} parent=39 // pred_check_branch
        %357 = sbr.rel (%p355) target = $region44
      $region43: #{multi_head_self_attention.2} parent=39 // pred_region
        %p358 = scmp.lt.s32.totalorder %s23, 1
        %s359 = scalar_select %p358, %s23, 1
        %p360 = scmp.lt.s32.totalorder %s24, 15
        %s361 = scalar_select %p360, %s24, 15
        %p362 = scmp.lt.s32.totalorder %s22, 0
        %s363 = scalar_select %p362, %s22, 0
        %s364 = sadd.s32 %s363, %s361
        %s365 = smul.addr %s359, 16
        %s366 = sadd.s32 %s364, %s365
        %s367 = smul.addr %s366, 8
        %s368 = scalar_lea.vmem %s3, %s367
      $region44: #{multi_head_self_attention.2} parent=39 // pred_fallthru
        _
    $region40: #{multi_head_self_attention.2} parent=5 // pred_fallthru
      _
  $region6: #{multi_head_self_attention.2} parent=0 // loop_footer
    %s13 = sadd.s32 1, %s9
  $region7: #{multi_head_self_attention.2} parent=0 // loop_footer_branch
    %8 = sbr.rel target = $region3
  $region8: #{multi_head_self_attention.2} parent=0 // loop_exit
    _

// kernel: multi_head_self_attention.3
$region0: #{multi_head_self_attention.3}
  #allocation0 [shape = 'u32[]', space=smem, size = 0x4, offset = 0x4, fixed_abs, tag = 'smem constant byte address 0x4 - core index']
  #allocation1 [shape = 'u32[144,128]{1,0:T(1,128)}', space=vmem, size = 0x12000, scoped, tag = 'internal scratch']
  #allocation2 [shape = 'f32[8,1]{1,0:T(8,128)}', space=vmem, size = 0x1000, scoped, tag = 'scratch operand']
  #allocation3 [shape = 'f32[8,1]{1,0:T(8,128)}', space=vmem, size = 0x1000, scoped, tag = 'scratch operand']
  #allocation4 [shape = 'f32[8,8]{1,0:T(8,128)}', space=vmem, size = 0x1000, scoped, tag = 'scratch operand']
  #allocation5 [shape = 'f32[8,32]{1,0:T(8,128)}', space=vmem, size = 0x1000, scoped, tag = 'scratch operand']
  %s0 = inlined_call_operand.vmem [shape: f32[2,4,128,8], index: 0, kind: input, shape index: {}]
  %s1 = inlined_call_operand.vmem [shape: f32[2,4,128,8], index: 1, kind: input, shape index: {}]
  %s2 = inlined_call_operand.vmem [shape: f32[2,4,128,8], index: 2, kind: input, shape index: {}]
  %s3 = inlined_call_operand.vmem [shape: f32[4,8,32], index: 3, kind: input, shape index: {}]
  %s4 = inlined_call_operand.vmem [shape: f32[1,32], index: 4, kind: input, shape index: {}]
  %s5 = inlined_call_operand.vmem [shape: f32[2,128,32], index: 5, kind: output, shape index: {}]
  %s6 = sld [smem:[#allocation0]]
  $region69: #{multi_head_self_attention.3} parent=0
    _
  %s8 = ssub.s32 1, %s6
  %s9 = scalar_select 0, %s8, %s6
  loop: start=0, step=1, limit=130
  $region2: #{multi_head_self_attention.3} parent=0 // loop_pre_header
    _
  $region3: #{multi_head_self_attention.3} parent=0 // loop_header
    %s11 = sphi 0, %s15
    %p12 = scmp.ge.s32.totalorder %s11, 130
    %s18 = sphi 0, %s44
    %s19 = sphi 0, %s40
    %s20 = sphi 0, %s36
    %s21 = sphi 0, %s32
    %s22 = sphi 0, %s18
    %s23 = sphi 0, %s19
    %s24 = sphi 0, %s20
    %s25 = sphi 0, %s21
    %s26 = sphi 0, %s22
    %s27 = sphi 0, %s23
    %s28 = sphi 0, %s24
    %s29 = sphi 0, %s25
    %s51 = sphi 0, %s53
    %s54 = sphi 0, %s51
    %s55 = sphi 0, %s54
    %s71 = sphi 0, %s55
    %s81 = sphi 0, %s83
    %s84 = sphi 0, %s81
    %s85 = sphi 0, %s84
    %s101 = sphi 0, %s85
    %s111 = sphi 0, %s113
    %s114 = sphi 0, %s111
    %s115 = sphi 0, %s114
    %s131 = sphi 0, %s115
    %s137 = sphi 0, %s139
    %s140 = sphi 0, %s137
    %s141 = sphi 0, %s140
    %s157 = sphi 0, %s141
    %s161 = sphi 0, %s161
    %s163 = sphi 0, %s161
    %s164 = sphi 0, %s163
    %s178 = sphi 0, %s164
    %s186 = sphi 0, %s188
    %s189 = sphi 0, %s186
    %s190 = sphi 0, %s189
    %s206 = sphi 0, %s190
  $region4: #{multi_head_self_attention.3} parent=0 // loop_header_branch
    %14 = sbr.rel (%p12) target = $region8
  $region5: #{multi_head_self_attention.3} parent=0 // loop_body
    %s16 = ssub.s32 %s11, 1
    %s17 = ssub.s32 %s11, 2
    %s30 = sadd.s32 1, %s21
    %p31 = scmp.ge.s32.totalorder %s30, 1
    %s32 = scalar_select %p31, 0, %s30
    %s33 = sadd.s32 1, %s20
    %s34 = scalar_select %p31, %s33, %s20
    %p35 = scmp.ge.s32.totalorder %s34, 4
    %s36 = scalar_select %p35, 0, %s34
    %s37 = sadd.s32 1, %s19
    %s38 = scalar_select %p35, %s37, %s19
    %p39 = scmp.ge.s32.totalorder %s38, 16
    %s40 = scalar_select %p39, 0, %s38
    %s41 = sadd.s32 1, %s18
    %s42 = scalar_select %p39, %s41, %s18
    %p43 = scmp.ge.s32.totalorder %s42, 2
    %s44 = scalar_select %p43, 0, %s42
    %s45 = ssub.s32 %s18, %s44
    %s46 = ssub.s32 %s20, %s36
    %s47 = sor.u32 %s45, %s46
    %s48 = ssub.s32 %s19, %s40
    %s49 = sor.u32 %s47, %s48
    %p50 = scmp.eq.s32.totalorder %s49, 0
    %s52 = sadd.s32 %s51, 1
    %s53 = scalar_select %p50, %s51, %s52
    %p56 = pneg %p50
    %p57 = scmp.eq.s32.totalorder %s11, 127
    %p58 = por %p56, %p57
    %p59 = scmp.ne.s32.totalorder %s51, %s54
    %p60 = scmp.eq.s32.totalorder %s11, 0
    %p61 = por %p59, %p60
    %p62 = scmp.ne.s32.totalorder %s51, %s54
    %p63 = scmp.eq.s32.totalorder %s16, 127
    %p64 = por %p62, %p63
    %p65 = scmp.ne.s32.totalorder %s54, %s55
    %p66 = scmp.eq.s32.totalorder %s16, 0
    %p67 = por %p65, %p66
    %p68 = scmp.ne.s32.totalorder %s54, %s55
    %p69 = scmp.eq.s32.totalorder %s17, 127
    %p70 = por %p68, %p69
    %p72 = scmp.ne.s32.totalorder %s55, %s71
    %p73 = scmp.eq.s32.totalorder %s17, 0
    %p74 = por %p72, %p73
    %s75 = ssub.s32 %s18, %s44
    %s76 = ssub.s32 %s20, %s36
    %s77 = sor.u32 %s75, %s76
    %s78 = ssub.s32 %s21, %s32
    %s79 = sor.u32 %s77, %s78
    %p80 = scmp.eq.s32.totalorder %s79, 0
    %s82 = sadd.s32 %s81, 1
    %s83 = scalar_select %p80, %s81, %s82
    %p86 = pneg %p80
    %p87 = scmp.eq.s32.totalorder %s11, 127
    %p88 = por %p86, %p87
    %p89 = scmp.ne.s32.totalorder %s81, %s84
    %p90 = scmp.eq.s32.totalorder %s11, 0
    %p91 = por %p89, %p90
    %p92 = scmp.ne.s32.totalorder %s81, %s84
    %p93 = scmp.eq.s32.totalorder %s16, 127
    %p94 = por %p92, %p93
    %p95 = scmp.ne.s32.totalorder %s84, %s85
    %p96 = scmp.eq.s32.totalorder %s16, 0
    %p97 = por %p95, %p96
    %p98 = scmp.ne.s32.totalorder %s84, %s85
    %p99 = scmp.eq.s32.totalorder %s17, 127
    %p100 = por %p98, %p99
    %p102 = scmp.ne.s32.totalorder %s85, %s101
    %p103 = scmp.eq.s32.totalorder %s17, 0
    %p104 = por %p102, %p103
    %s105 = ssub.s32 %s18, %s44
    %s106 = ssub.s32 %s20, %s36
    %s107 = sor.u32 %s105, %s106
    %s108 = ssub.s32 %s21, %s32
    %s109 = sor.u32 %s107, %s108
    %p110 = scmp.eq.s32.totalorder %s109, 0
    %s112 = sadd.s32 %s111, 1
    %s113 = scalar_select %p110, %s111, %s112
    %p116 = pneg %p110
    %p117 = scmp.eq.s32.totalorder %s11, 127
    %p118 = por %p116, %p117
    %p119 = scmp.ne.s32.totalorder %s111, %s114
    %p120 = scmp.eq.s32.totalorder %s11, 0
    %p121 = por %p119, %p120
    %p122 = scmp.ne.s32.totalorder %s111, %s114
    %p123 = scmp.eq.s32.totalorder %s16, 127
    %p124 = por %p122, %p123
    %p125 = scmp.ne.s32.totalorder %s114, %s115
    %p126 = scmp.eq.s32.totalorder %s16, 0
    %p127 = por %p125, %p126
    %p128 = scmp.ne.s32.totalorder %s114, %s115
    %p129 = scmp.eq.s32.totalorder %s17, 127
    %p130 = por %p128, %p129
    %p132 = scmp.ne.s32.totalorder %s115, %s131
    %p133 = scmp.eq.s32.totalorder %s17, 0
    %p134 = por %p132, %p133
    %s135 = ssub.s32 %s20, %s36
    %p136 = scmp.eq.s32.totalorder %s135, 0
    %s138 = sadd.s32 %s137, 1
    %s139 = scalar_select %p136, %s137, %s138
    %p142 = pneg %p136
    %p143 = scmp.eq.s32.totalorder %s11, 127
    %p144 = por %p142, %p143
    %p145 = scmp.ne.s32.totalorder %s137, %s140
    %p146 = scmp.eq.s32.totalorder %s11, 0
    %p147 = por %p145, %p146
    %p148 = scmp.ne.s32.totalorder %s137, %s140
    %p149 = scmp.eq.s32.totalorder %s16, 127
    %p150 = por %p148, %p149
    %p151 = scmp.ne.s32.totalorder %s140, %s141
    %p152 = scmp.eq.s32.totalorder %s16, 0
    %p153 = por %p151, %p152
    %p154 = scmp.ne.s32.totalorder %s140, %s141
    %p155 = scmp.eq.s32.totalorder %s17, 127
    %p156 = por %p154, %p155
    %p158 = scmp.ne.s32.totalorder %s141, %s157
    %p159 = scmp.eq.s32.totalorder %s17, 0
    %p160 = por %p158, %p159
    %s162 = sadd.s32 %s161, 1
    %p165 = scmp.eq.s32.totalorder %s11, 127
    %p166 = scmp.ne.s32.totalorder %s161, %s163
    %p167 = scmp.eq.s32.totalorder %s11, 0
    %p168 = por %p166, %p167
    %p169 = scmp.ne.s32.totalorder %s161, %s163
    %p170 = scmp.eq.s32.totalorder %s16, 127
    %p171 = por %p169, %p170
    %p172 = scmp.ne.s32.totalorder %s163, %s164
    %p173 = scmp.eq.s32.totalorder %s16, 0
    %p174 = por %p172, %p173
    %p175 = scmp.ne.s32.totalorder %s163, %s164
    %p176 = scmp.eq.s32.totalorder %s17, 127
    %p177 = por %p175, %p176
    %p179 = scmp.ne.s32.totalorder %s164, %s178
    %p180 = scmp.eq.s32.totalorder %s17, 0
    %p181 = por %p179, %p180
    %s182 = ssub.s32 %s18, %s44
    %s183 = ssub.s32 %s19, %s40
    %s184 = sor.u32 %s182, %s183
    %p185 = scmp.eq.s32.totalorder %s184, 0
    %s187 = sadd.s32 %s186, 1
    %s188 = scalar_select %p185, %s186, %s187
    %p191 = pneg %p185
    %p192 = scmp.eq.s32.totalorder %s11, 127
    %p193 = por %p191, %p192
    %p194 = scmp.ne.s32.totalorder %s186, %s189
    %p195 = scmp.eq.s32.totalorder %s11, 0
    %p196 = por %p194, %p195
    %p197 = scmp.ne.s32.totalorder %s186, %s189
    %p198 = scmp.eq.s32.totalorder %s16, 127
    %p199 = por %p197, %p198
    %p200 = scmp.ne.s32.totalorder %s189, %s190
    %p201 = scmp.eq.s32.totalorder %s16, 0
    %p202 = por %p200, %p201
    %p203 = scmp.ne.s32.totalorder %s189, %s190
    %p204 = scmp.eq.s32.totalorder %s17, 127
    %p205 = por %p203, %p204
    %p207 = scmp.ne.s32.totalorder %s190, %s206
    %p208 = scmp.eq.s32.totalorder %s17, 0
    %p209 = por %p207, %p208
    %p210 = scmp.le.s32.totalorder 1, %s11
    %p211 = scmp.lt.s32.totalorder %s11, 129
    %p212 = pnand %p210, %p211
    %p213 = pneg %p212
    // Predicated region
    $region9: #{multi_head_self_attention.3} parent=5 // pred_check
      _
    $region10: #{multi_head_self_attention.3} parent=5 // pred_check_branch
      %215 = sbr.rel (%p212) target = $region12
    $region11: #{multi_head_self_attention.3} parent=5 // pred_region
      %s216 = ssub.s32 %s11, 1
      // Predicated region
      $region13: #{multi_head_self_attention.3} parent=11 // pred_check
        %p217 = pneg %p174
      $region14: #{multi_head_self_attention.3} parent=11 // pred_check_branch
        %219 = sbr.rel (%p217) target = $region16
      $region15: #{multi_head_self_attention.3} parent=11 // pred_region
        _
      $region16: #{multi_head_self_attention.3} parent=11 // pred_fallthru
        _
    $region12: #{multi_head_self_attention.3} parent=5 // pred_fallthru
      _
    %p220 = scmp.lt.s32.totalorder %s11, 128
    // Predicated region
    $region17: #{multi_head_self_attention.3} parent=5 // pred_check
      %p221 = pneg %p220
    $region18: #{multi_head_self_attention.3} parent=5 // pred_check_branch
      %223 = sbr.rel (%p221) target = $region20
    $region19: #{multi_head_self_attention.3} parent=5 // pred_region
      // Predicated region
      $region21: #{multi_head_self_attention.3} parent=19 // pred_check
        %p224 = pneg %p61
      $region22: #{multi_head_self_attention.3} parent=19 // pred_check_branch
        %226 = sbr.rel (%p224) target = $region24
      $region23: #{multi_head_self_attention.3} parent=19 // pred_region
        %p227 = scmp.lt.s32.totalorder %s18, 1
        %s228 = scalar_select %p227, %s18, 1
        %p229 = scmp.lt.s32.totalorder %s20, 3
        %s230 = scalar_select %p229, %s20, 3
        %p231 = scmp.lt.s32.totalorder %s19, 15
        %s232 = scalar_select %p231, %s19, 15
        %s233 = smul.addr %s230, 16
        %s234 = sadd.s32 %s232, %s233
        %s235 = smul.addr %s228, 64
        %s236 = sadd.s32 %s234, %s235
        %s237 = smul.addr %s236, 8
        %s238 = scalar_lea.vmem %s0, %s237
      $region24: #{multi_head_self_attention.3} parent=19 // pred_fallthru
        _
      // Predicated region
      $region25: #{multi_head_self_attention.3} parent=19 // pred_check
        %p239 = pneg %p91
      $region26: #{multi_head_self_attention.3} parent=19 // pred_check_branch
        %241 = sbr.rel (%p239) target = $region28
      $region27: #{multi_head_self_attention.3} parent=19 // pred_region
        %s242 = smul.u32 16, %s21
        %p243 = scmp.lt.s32.totalorder %s18, 1
        %s244 = scalar_select %p243, %s18, 1
        %p245 = scmp.lt.s32.totalorder %s20, 3
        %s246 = scalar_select %p245, %s20, 3
        %p247 = scmp.lt.s32.totalorder %s242, 15
        %s248 = scalar_select %p247, %s242, 15
        %s249 = smul.addr %s246, 16
        %s250 = sadd.s32 %s248, %s249
        %s251 = smul.addr %s244, 64
        %s252 = sadd.s32 %s250, %s251
        %s253 = smul.addr %s252, 8
        %s254 = scalar_lea.vmem %s1, %s253
        %s255 = smul.u32 16, %s21
      $region28: #{multi_head_self_attention.3} parent=19 // pred_fallthru
        _
      // Predicated region
      $region29: #{multi_head_self_attention.3} parent=19 // pred_check
        %p256 = pneg %p121
      $region30: #{multi_head_self_attention.3} parent=19 // pred_check_branch
        %258 = sbr.rel (%p256) target = $region32
      $region31: #{multi_head_self_attention.3} parent=19 // pred_region
        %s259 = smul.u32 16, %s21
        %p260 = scmp.lt.s32.totalorder %s18, 1
        %s261 = scalar_select %p260, %s18, 1
        %p262 = scmp.lt.s32.totalorder %s20, 3
        %s263 = scalar_select %p262, %s20, 3
        %p264 = scmp.lt.s32.totalorder %s259, 15
        %s265 = scalar_select %p264, %s259, 15
        %s266 = smul.addr %s263, 16
        %s267 = sadd.s32 %s265, %s266
        %s268 = smul.addr %s261, 64
        %s269 = sadd.s32 %s267, %s268
        %s270 = smul.addr %s269, 8
        %s271 = scalar_lea.vmem %s2, %s270
        %s272 = smul.u32 16, %s21
      $region32: #{multi_head_self_attention.3} parent=19 // pred_fallthru
        _
      // Predicated region
      $region33: #{multi_head_self_attention.3} parent=19 // pred_check
        %p273 = pneg %p147
      $region34: #{multi_head_self_attention.3} parent=19 // pred_check_branch
        %275 = sbr.rel (%p273) target = $region36
      $region35: #{multi_head_self_attention.3} parent=19 // pred_region
        %p276 = scmp.lt.s32.totalorder %s20, 3
        %s277 = scalar_select %p276, %s20, 3
        %s278 = smul.addr %s277, 8
        %s279 = scalar_lea.vmem %s3, %s278
      $region36: #{multi_head_self_attention.3} parent=19 // pred_fallthru
        _
    $region20: #{multi_head_self_attention.3} parent=5 // pred_fallthru
      _
    %p280 = scmp.le.s32.totalorder 1, %s11
    %p281 = scmp.lt.s32.totalorder %s11, 129
    %p282 = pnand %p280, %p281
    %p283 = pneg %p282
    // Predicated region
    $region37: #{multi_head_self_attention.3} parent=5 // pred_check
      _
    $region38: #{multi_head_self_attention.3} parent=5 // pred_check_branch
      %285 = sbr.rel (%p282) target = $region40
    $region39: #{multi_head_self_attention.3} parent=5 // pred_region
      %s286 = ssub.s32 %s11, 1
      %p287 = scmp.lt.s32.totalorder %s22, 1
      %s288 = scalar_select %p287, %s22, 1
      %p289 = scmp.lt.s32.totalorder %s24, 3
      %s290 = scalar_select %p289, %s24, 3
      %p291 = scmp.lt.s32.totalorder %s23, 15
      %s292 = scalar_select %p291, %s23, 15
      %s293 = smul.addr %s290, 16
      %s294 = sadd.s32 %s292, %s293
      %s295 = smul.addr %s288, 64
      %s296 = sadd.s32 %s294, %s295
      %s297 = smul.addr %s296, 8
      %s298 = scalar_lea.vmem %s0, %s297
      %p299 = pneg %p67
      %p300 = pneg %p64
      %s301 = smul.u32 16, %s25
      %p302 = scmp.lt.s32.totalorder %s22, 1
      %s303 = scalar_select %p302, %s22, 1
      %p304 = scmp.lt.s32.totalorder %s24, 3
      %s305 = scalar_select %p304, %s24, 3
      %p306 = scmp.lt.s32.totalorder %s301, 15
      %s307 = scalar_select %p306, %s301, 15
      %s308 = smul.addr %s305, 16
      %s309 = sadd.s32 %s307, %s308
      %s310 = smul.addr %s303, 64
      %s311 = sadd.s32 %s309, %s310
      %s312 = smul.addr %s311, 8
      %s313 = scalar_lea.vmem %s1, %s312
      %p314 = pneg %p97
      %p315 = pneg %p94
      %s316 = smul.u32 16, %s25
      %p317 = scmp.lt.s32.totalorder %s22, 1
      %s318 = scalar_select %p317, %s22, 1
      %p319 = scmp.lt.s32.totalorder %s24, 3
      %s320 = scalar_select %p319, %s24, 3
      %p321 = scmp.lt.s32.totalorder %s316, 15
      %s322 = scalar_select %p321, %s316, 15
      %s323 = smul.addr %s320, 16
      %s324 = sadd.s32 %s322, %s323
      %s325 = smul.addr %s318, 64
      %s326 = sadd.s32 %s324, %s325
      %s327 = smul.addr %s326, 8
      %s328 = scalar_lea.vmem %s2, %s327
      %p329 = pneg %p127
      %p330 = pneg %p124
      %p331 = scmp.lt.s32.totalorder %s24, 3
      %s332 = scalar_select %p331, %s24, 3
      %s333 = smul.addr %s332, 8
      %s334 = scalar_lea.vmem %s3, %s333
      %p335 = pneg %p153
      %p336 = pneg %p150
      %p337 = pneg %p174
      %p338 = pneg %p171
      %p339 = pneg %p202
      %p340 = pneg %p199
      %p341 = scmp.lt.s32.totalorder %s22, 1
      %s342 = scalar_select %p341, %s22, 1
      %p343 = scmp.lt.s32.totalorder %s23, 15
      %s344 = scalar_select %p343, %s23, 15
      %s345 = smul.addr %s342, 16
      %s346 = sadd.s32 %s344, %s345
      %s347 = smul.addr %s346, 8
      %s348 = scalar_lea.vmem %s5, %s347
      %p349 = scmp.lt.s32.totalorder %s22, 1
      %s350 = scalar_select %p349, %s22, 1
      %p351 = scmp.lt.s32.totalorder %s24, 3
      %s352 = scalar_select %p351, %s24, 3
      %p353 = scmp.lt.s32.totalorder %s23, 15
      %s354 = scalar_select %p353, %s23, 15
      %s355 = smul.addr %s352, 16
      %s356 = sadd.s32 %s354, %s355
      %s357 = smul.addr %s350, 64
      %s358 = sadd.s32 %s356, %s357
      %s359 = smul.addr %s358, 8
      %s360 = scalar_lea.vmem %s0, %s359
      %s361 = smul.u32 16, %s25
      %p362 = scmp.lt.s32.totalorder %s22, 1
      %s363 = scalar_select %p362, %s22, 1
      %p364 = scmp.lt.s32.totalorder %s24, 3
      %s365 = scalar_select %p364, %s24, 3
      %p366 = scmp.lt.s32.totalorder %s361, 15
      %s367 = scalar_select %p366, %s361, 15
      %s368 = smul.addr %s365, 16
      %s369 = sadd.s32 %s367, %s368
      %s370 = smul.addr %s363, 64
      %s371 = sadd.s32 %s369, %s370
      %s372 = smul.addr %s371, 8
      %s373 = scalar_lea.vmem %s1, %s372
      %s374 = smul.u32 16, %s25
      %s375 = smul.u32 16, %s25
      %p376 = scmp.lt.s32.totalorder %s22, 1
      %s377 = scalar_select %p376, %s22, 1
      %p378 = scmp.lt.s32.totalorder %s24, 3
      %s379 = scalar_select %p378, %s24, 3
      %p380 = scmp.lt.s32.totalorder %s375, 15
      %s381 = scalar_select %p380, %s375, 15
      %s382 = smul.addr %s379, 16
      %s383 = sadd.s32 %s381, %s382
      %s384 = smul.addr %s377, 64
      %s385 = sadd.s32 %s383, %s384
      %s386 = smul.addr %s385, 8
      %s387 = scalar_lea.vmem %s2, %s386
      %s388 = smul.u32 16, %s25
      %p389 = scmp.lt.s32.totalorder %s24, 3
      %s390 = scalar_select %p389, %s24, 3
      %s391 = smul.addr %s390, 8
      %s392 = scalar_lea.vmem %s3, %s391
      %p393 = scmp.lt.s32.totalorder %s22, 1
      %s394 = scalar_select %p393, %s22, 1
      %p395 = scmp.lt.s32.totalorder %s23, 15
      %s396 = scalar_select %p395, %s23, 15
      %s397 = smul.addr %s394, 16
      %s398 = sadd.s32 %s396, %s397
      %s399 = smul.addr %s398, 8
      %s400 = scalar_lea.vmem %s5, %s399
      %p401 = scmp.eq.s32.totalorder %s24, 0
      %p402 = scmp.eq.s32.totalorder %s25, 0
      %p403 = pnand %p401, %p402
      %p404 = pneg %p403
      // Predicated region
      $region41: #{multi_head_self_attention.3} parent=39 // pred_check
        _
      $region42: #{multi_head_self_attention.3} parent=39 // pred_check_branch
        %406 = sbr.rel (%p403) target = $region44
      $region43: #{multi_head_self_attention.3} parent=39 // pred_region
        %vm407 = vcmask 261120
        %408 = vst.msk [vmem:[#allocation5] sm:$0xff] %vm407, 0.0
      $region44: #{multi_head_self_attention.3} parent=39 // pred_fallthru
        _
      // Predicated region
      $region45: #{multi_head_self_attention.3} parent=39 // pred_check
        %p409 = pneg %p402
      $region46: #{multi_head_self_attention.3} parent=39 // pred_check_branch
        %411 = sbr.rel (%p409) target = $region48
      $region47: #{multi_head_self_attention.3} parent=39 // pred_region
        %vm412 = vcmask 7168
        %413 = vst.msk [vmem:[#allocation2] sm:$0xff] %vm412, -inf
        %414 = vst.msk [vmem:[#allocation3] sm:$0xff] %vm412, 0.0
        %vm415 = vcmask 64512
        %416 = vst.msk [vmem:[#allocation4] sm:$0xff] %vm415, 0.0
      $region48: #{multi_head_self_attention.3} parent=39 // pred_fallthru
        _
      %v417 = vld [vmem:[%s360] sm:$0xff]
      %v418 = vld [vmem:[%s373] sm:$0xff]
      %v419 = vld [vmem:[%s373 + $0x8] sm:$0xff]
      %v420 = vld [vmem:[%s373 + $0x10] sm:$0xff]
      %v421 = vld [vmem:[%s373 + $0x18] sm:$0xff]
      %v422 = vld [vmem:[%s373 + $0x20] sm:$0xff]
      %v423 = vld [vmem:[%s373 + $0x28] sm:$0xff]
      %v424 = vld [vmem:[%s373 + $0x30] sm:$0xff]
      %v425 = vld [vmem:[%s373 + $0x38] sm:$0xff]
      %v426 = vld [vmem:[%s373 + $0x40] sm:$0xff]
      %v427 = vld [vmem:[%s373 + $0x48] sm:$0xff]
      %v428 = vld [vmem:[%s373 + $0x50] sm:$0xff]
      %v429 = vld [vmem:[%s373 + $0x58] sm:$0xff]
      %v430 = vld [vmem:[%s373 + $0x60] sm:$0xff]
      %v431 = vld [vmem:[%s373 + $0x68] sm:$0xff]
      %v432 = vld [vmem:[%s373 + $0x70] sm:$0xff]
      %v433 = vld [vmem:[%s373 + $0x78] sm:$0xff]
      %v434 = vld [vmem:[%s387] sm:$0xff]
      %v435 = vld [vmem:[%s387 + $0x8] sm:$0xff]
      %v436 = vld [vmem:[%s387 + $0x10] sm:$0xff]
      %v437 = vld [vmem:[%s387 + $0x18] sm:$0xff]
      %v438 = vld [vmem:[%s387 + $0x20] sm:$0xff]
      %v439 = vld [vmem:[%s387 + $0x28] sm:$0xff]
      %v440 = vld [vmem:[%s387 + $0x30] sm:$0xff]
      %v441 = vld [vmem:[%s387 + $0x38] sm:$0xff]
      %v442 = vld [vmem:[%s387 + $0x40] sm:$0xff]
      %v443 = vld [vmem:[%s387 + $0x48] sm:$0xff]
      %v444 = vld [vmem:[%s387 + $0x50] sm:$0xff]
      %v445 = vld [vmem:[%s387 + $0x58] sm:$0xff]
      %v446 = vld [vmem:[%s387 + $0x60] sm:$0xff]
      %v447 = vld [vmem:[%s387 + $0x68] sm:$0xff]
      %v448 = vld [vmem:[%s387 + $0x70] sm:$0xff]
      %v449 = vld [vmem:[%s387 + $0x78] sm:$0xff]
      %vm450 = vcmask 64512
      %v452 = vsel %vm450, %v417, 0
      %v455 = vsel %vm450, %v418, 0
      %v458 = vsel %vm450, %v419, 0
      %v461 = vsel %vm450, %v420, 0
      %v464 = vsel %vm450, %v421, 0
      %v467 = vsel %vm450, %v422, 0
      %v470 = vsel %vm450, %v423, 0
      %v473 = vsel %vm450, %v424, 0
      %v476 = vsel %vm450, %v425, 0
      %v479 = vsel %vm450, %v426, 0
      %v482 = vsel %vm450, %v427, 0
      %v485 = vsel %vm450, %v428, 0
      %v488 = vsel %vm450, %v429, 0
      %v491 = vsel %vm450, %v430, 0
      %v494 = vsel %vm450, %v431, 0
      %v497 = vsel %vm450, %v432, 0
      %v500 = vsel %vm450, %v433, 0
      %502 = vmatprep.subr.mxu0 0.0
      %503 = vmatpush1.xpose.msra.mxu0 %v500
      %504 = vmatprep.subr.mxu0 0.0
      %505 = vmatpush1.xpose.msra.mxu0 %v497
      %506 = vmatprep.subr.mxu0 0.0
      %507 = vmatpush1.xpose.msra.mxu0 %v494
      %508 = vmatprep.subr.mxu0 0.0
      %509 = vmatpush1.xpose.msra.mxu0 %v491
      %510 = vmatprep.subr.mxu0 0.0
      %511 = vmatpush1.xpose.msra.mxu0 %v488
      %512 = vmatprep.subr.mxu0 0.0
      %513 = vmatpush1.xpose.msra.mxu0 %v485
      %514 = vmatprep.subr.mxu0 0.0
      %515 = vmatpush1.xpose.msra.mxu0 %v482
      %516 = vmatprep.subr.mxu0 0.0
      %517 = vmatpush1.xpose.msra.mxu0 %v479
      %518 = vmatprep.subr.mxu0 0.0
      %519 = vmatpush1.xpose.msra.mxu0 %v476
      %520 = vmatprep.subr.mxu0 0.0
      %521 = vmatpush1.xpose.msra.mxu0 %v473
      %522 = vmatprep.subr.mxu0 0.0
      %523 = vmatpush1.xpose.msra.mxu0 %v470
      %524 = vmatprep.subr.mxu0 0.0
      %525 = vmatpush1.xpose.msra.mxu0 %v467
      %526 = vmatprep.subr.mxu0 0.0
      %527 = vmatpush1.xpose.msra.mxu0 %v464
      %528 = vmatprep.subr.mxu0 0.0
      %529 = vmatpush1.xpose.msra.mxu0 %v461
      %530 = vmatprep.subr.mxu0 0.0
      %531 = vmatpush1.xpose.msra.mxu0 %v458
      %532 = vmatprep.subr.mxu0 0.0
      %533 = vmatpush1.xpose.msra.mxu0 %v455
      %534 = vmatprep.subr.mxu0 0.0
      %535 = vmatpush2.xpose.msra.mxu0 0.0
      %536 = vmatprep.subr.mxu0 0.0
      %537 = vmatpush2.xpose.msra.mxu0 0.0
      %538 = vmatprep.subr.mxu0 0.0
      %539 = vmatpush2.xpose.msra.mxu0 0.0
      %540 = vmatprep.subr.mxu0 0.0
      %541 = vmatpush2.xpose.msra.mxu0 0.0
      %542 = vmatprep.subr.mxu0 0.0
      %543 = vmatpush2.xpose.msra.mxu0 0.0
      %544 = vmatprep.subr.mxu0 0.0
      %545 = vmatpush2.xpose.msra.mxu0 0.0
      %546 = vmatprep.subr.mxu0 0.0
      %547 = vmatpush2.xpose.msra.mxu0 0.0
      %548 = vmatprep.subr.mxu0 0.0
      %549 = vmatpush2.xpose.msra.mxu0 0.0
      %550 = vmatprep.subr.mxu0 0.0
      %551 = vmatpush2.xpose.msra.mxu0 0.0
      %552 = vmatprep.subr.mxu0 0.0
      %553 = vmatpush2.xpose.msra.mxu0 0.0
      %554 = vmatprep.subr.mxu0 0.0
      %555 = vmatpush2.xpose.msra.mxu0 0.0
      %556 = vmatprep.subr.mxu0 0.0
      %557 = vmatpush2.xpose.msra.mxu0 0.0
      %558 = vmatprep.subr.mxu0 0.0
      %559 = vmatpush2.xpose.msra.mxu0 0.0
      %560 = vmatprep.subr.mxu0 0.0
      %561 = vmatpush2.xpose.msra.mxu0 0.0
      %562 = vmatprep.subr.mxu0 0.0
      %563 = vmatpush2.xpose.msra.mxu0 0.0
      %564 = vmatprep.subr.mxu0 0.0
      %565 = vmatpush2.xpose.msra.mxu0 0.0
      %566 = vmatprep.mubr.f32.mxu0 0.0
      %567 = vmatmul.mubr.f32.gmra.mxu0 %v452
      %v568 = vpop.f32.mrf.mxu0
      %v569 = vadd.f32 0.0, %v568
      %v570 = vpop.f32.mrf.mxu0
      %571 = vdwg.mxu0
      %s572 = smul.u32 %s25, 128
      %v573 = vlaneseq
      %v574 = vand.u32 %v573, 127
      %v575 = vstv %s572
      %v576 = vadd.s32 %v575, %v574
      %vm577 = vcmp.lt.s32.totalorder %v576, 8
      %v578 = vsel %vm577, %v569, -1e+30
      %v579 = vld [vmem:[#allocation2] sm:$0xff]
      %580 = vmax.xlane.f32.xlu0 %v578
      %v581 = vpop.xlane.xlu0 %580
      %v582 = vmax.f32 %v579, %v581
      %v583 = vsub.f32 %v579, %v582
      %v584 = vmul.f32 %v583, 1.442695
      %v585 = vpow.pop %v584
      %587 = vset.pattern.permute.xlu0 0
      %588 = vperm.xlu0 %587, %v582
      %v589 = vpop.permute.xlu0 %588
      %v591 = vsub.f32 %v578, %v589
      %v592 = vmul.f32 %v591, 1.442695
      %v593 = vpow.pop %v592
      %v594 = vld [vmem:[#allocation3] sm:$0xff]
      %v595 = vmul.f32 %v585, %v594
      %596 = vadd.xlane.f32.xlu0 %v593
      %v597 = vpop.xlane.xlu0 %596
      %v598 = vadd.f32 %v595, %v597
      %vm599 = vcmask 7168
      %600 = vst.msk [vmem:[#allocation3] sm:$0xff] %vm599, %v598
      %v601 = vld [vmem:[#allocation4] sm:$0xff]
      %603 = vset.pattern.permute.xlu0 0
      %604 = vperm.xlu0 %603, %v585
      %v605 = vpop.permute.xlu0 %604
      %v607 = vmul.f32 %v605, %v601
      %608 = vmatprep.subr.mxu0 0.0
      %609 = vmatpush1.msra.mxu0 %v449
      %610 = vmatprep.subr.mxu0 0.0
      %611 = vmatpush1.msra.mxu0 %v448
      %612 = vmatprep.subr.mxu0 0.0
      %613 = vmatpush1.msra.mxu0 %v447
      %614 = vmatprep.subr.mxu0 0.0
      %615 = vmatpush1.msra.mxu0 %v446
      %616 = vmatprep.subr.mxu0 0.0
      %617 = vmatpush1.msra.mxu0 %v445
      %618 = vmatprep.subr.mxu0 0.0
      %619 = vmatpush1.msra.mxu0 %v444
      %620 = vmatprep.subr.mxu0 0.0
      %621 = vmatpush1.msra.mxu0 %v443
      %622 = vmatprep.subr.mxu0 0.0
      %623 = vmatpush1.msra.mxu0 %v442
      %624 = vmatprep.subr.mxu0 0.0
      %625 = vmatpush1.msra.mxu0 %v441
      %626 = vmatprep.subr.mxu0 0.0
      %627 = vmatpush1.msra.mxu0 %v440
      %628 = vmatprep.subr.mxu0 0.0
      %629 = vmatpush1.msra.mxu0 %v439
      %630 = vmatprep.subr.mxu0 0.0
      %631 = vmatpush1.msra.mxu0 %v438
      %632 = vmatprep.subr.mxu0 0.0
      %633 = vmatpush1.msra.mxu0 %v437
      %634 = vmatprep.subr.mxu0 0.0
      %635 = vmatpush1.msra.mxu0 %v436
      %636 = vmatprep.subr.mxu0 0.0
      %637 = vmatpush1.msra.mxu0 %v435
      %638 = vmatprep.subr.mxu0 0.0
      %639 = vmatpush1.msra.mxu0 %v434
      %640 = vmatprep.subr.mxu0 0.0
      %641 = vmatpush2.msra.mxu0 0.0
      %642 = vmatprep.subr.mxu0 0.0
      %643 = vmatpush2.msra.mxu0 0.0
      %644 = vmatprep.subr.mxu0 0.0
      %645 = vmatpush2.msra.mxu0 0.0
      %646 = vmatprep.subr.mxu0 0.0
      %647 = vmatpush2.msra.mxu0 0.0
      %648 = vmatprep.subr.mxu0 0.0
      %649 = vmatpush2.msra.mxu0 0.0
      %650 = vmatprep.subr.mxu0 0.0
      %651 = vmatpush2.msra.mxu0 0.0
      %652 = vmatprep.subr.mxu0 0.0
      %653 = vmatpush2.msra.mxu0 0.0
      %654 = vmatprep.subr.mxu0 0.0
      %655 = vmatpush2.msra.mxu0 0.0
      %656 = vmatprep.subr.mxu0 0.0
      %657 = vmatpush2.msra.mxu0 0.0
      %658 = vmatprep.subr.mxu0 0.0
      %659 = vmatpush2.msra.mxu0 0.0
      %660 = vmatprep.subr.mxu0 0.0
      %661 = vmatpush2.msra.mxu0 0.0
      %662 = vmatprep.subr.mxu0 0.0
      %663 = vmatpush2.msra.mxu0 0.0
      %664 = vmatprep.subr.mxu0 0.0
      %665 = vmatpush2.msra.mxu0 0.0
      %666 = vmatprep.subr.mxu0 0.0
      %667 = vmatpush2.msra.mxu0 0.0
      %668 = vmatprep.subr.mxu0 0.0
      %669 = vmatpush2.msra.mxu0 0.0
      %670 = vmatprep.subr.mxu0 0.0
      %671 = vmatpush2.msra.mxu0 0.0
      %672 = vmatprep.mubr.f32.mxu0 0.0
      %673 = vmatmul.mubr.f32.gmra.mxu0 %v593
      %v674 = vpop.f32.mrf.mxu0
      %v675 = vadd.f32 0.0, %v674
      %v676 = vpop.f32.mrf.mxu0
      %677 = vdwg.mxu0
      %v678 = vadd.f32 %v607, %v675
      %679 = vst.msk [vmem:[#allocation4] sm:$0xff] %vm450, %v678
      %680 = vst.msk [vmem:[#allocation2] sm:$0xff] %vm599, %v582
      // Predicated region
      $region49: #{multi_head_self_attention.3} parent=39 // pred_check
        %p681 = pneg %p402
      $region50: #{multi_head_self_attention.3} parent=39 // pred_check_branch
        %683 = sbr.rel (%p681) target = $region52
      $region51: #{multi_head_self_attention.3} parent=39 // pred_region
        %v684 = vld [vmem:[#allocation4] sm:$0xff]
        %v685 = vld [vmem:[#allocation3] sm:$0xff]
        %v686 = vrcp.pop %v685
        %688 = vset.pattern.permute.xlu0 0
        %689 = vperm.xlu0 %688, %v686
        %v690 = vpop.permute.xlu0 %689
        %v692 = vmul.f32 %v684, %v690
        %v693 = vld [vmem:[#allocation5] sm:$0xff]
        %v694 = vld [vmem:[%s392] sm:$0xff]
        %v696 = vsel %vm450, %v692, 0
        %698 = vmatprep.subr.mxu0 0.0
        %699 = vmatpush1.msra.mxu0 0.0
        %700 = vmatprep.subr.mxu0 0.0
        %701 = vmatpush1.msra.mxu0 0.0
        %702 = vmatprep.subr.mxu0 0.0
        %703 = vmatpush1.msra.mxu0 0.0
        %704 = vmatprep.subr.mxu0 0.0
        %705 = vmatpush1.msra.mxu0 0.0
        %706 = vmatprep.subr.mxu0 0.0
        %707 = vmatpush1.msra.mxu0 0.0
        %708 = vmatprep.subr.mxu0 0.0
        %709 = vmatpush1.msra.mxu0 0.0
        %710 = vmatprep.subr.mxu0 0.0
        %711 = vmatpush1.msra.mxu0 0.0
        %712 = vmatprep.subr.mxu0 0.0
        %713 = vmatpush1.msra.mxu0 0.0
        %714 = vmatprep.subr.mxu0 0.0
        %715 = vmatpush1.msra.mxu0 0.0
        %716 = vmatprep.subr.mxu0 0.0
        %717 = vmatpush1.msra.mxu0 0.0
        %718 = vmatprep.subr.mxu0 0.0
        %719 = vmatpush1.msra.mxu0 0.0
        %720 = vmatprep.subr.mxu0 0.0
        %721 = vmatpush1.msra.mxu0 0.0
        %722 = vmatprep.subr.mxu0 0.0
        %723 = vmatpush1.msra.mxu0 0.0
        %724 = vmatprep.subr.mxu0 0.0
        %725 = vmatpush1.msra.mxu0 0.0
        %726 = vmatprep.subr.mxu0 0.0
        %727 = vmatpush1.msra.mxu0 0.0
        %728 = vmatprep.subr.mxu0 0.0
        %729 = vmatpush1.msra.mxu0 %v694
        %730 = vmatprep.subr.mxu0 0.0
        %731 = vmatpush2.msra.mxu0 0.0
        %732 = vmatprep.subr.mxu0 0.0
        %733 = vmatpush2.msra.mxu0 0.0
        %734 = vmatprep.subr.mxu0 0.0
        %735 = vmatpush2.msra.mxu0 0.0
        %736 = vmatprep.subr.mxu0 0.0
        %737 = vmatpush2.msra.mxu0 0.0
        %738 = vmatprep.subr.mxu0 0.0
        %739 = vmatpush2.msra.mxu0 0.0
        %740 = vmatprep.subr.mxu0 0.0
        %741 = vmatpush2.msra.mxu0 0.0
        %742 = vmatprep.subr.mxu0 0.0
        %743 = vmatpush2.msra.mxu0 0.0
        %744 = vmatprep.subr.mxu0 0.0
        %745 = vmatpush2.msra.mxu0 0.0
        %746 = vmatprep.subr.mxu0 0.0
        %747 = vmatpush2.msra.mxu0 0.0
        %748 = vmatprep.subr.mxu0 0.0
        %749 = vmatpush2.msra.mxu0 0.0
        %750 = vmatprep.subr.mxu0 0.0
        %751 = vmatpush2.msra.mxu0 0.0
        %752 = vmatprep.subr.mxu0 0.0
        %753 = vmatpush2.msra.mxu0 0.0
        %754 = vmatprep.subr.mxu0 0.0
        %755 = vmatpush2.msra.mxu0 0.0
        %756 = vmatprep.subr.mxu0 0.0
        %757 = vmatpush2.msra.mxu0 0.0
        %758 = vmatprep.subr.mxu0 0.0
        %759 = vmatpush2.msra.mxu0 0.0
        %760 = vmatprep.subr.mxu0 0.0
        %761 = vmatpush2.msra.mxu0 0.0
        %762 = vmatprep.mubr.f32.mxu0 0.0
        %763 = vmatmul.mubr.f32.gmra.mxu0 %v696
        %v764 = vpop.f32.mrf.mxu0
        %v765 = vadd.f32 0.0, %v764
        %v766 = vpop.f32.mrf.mxu0
        %767 = vdwg.mxu0
        %v768 = vadd.f32 %v693, %v765
        %vm769 = vcmask 261120
        %770 = vst.msk [vmem:[#allocation5] sm:$0xff] %vm769, %v768
      $region52: #{multi_head_self_attention.3} parent=39 // pred_fallthru
        _
      %p771 = scmp.eq.s32.totalorder %s24, 3
      %p772 = pnand %p771, %p402
      %p773 = pneg %p772
      // Predicated region
      $region53: #{multi_head_self_attention.3} parent=39 // pred_check
        _
      $region54: #{multi_head_self_attention.3} parent=39 // pred_check_branch
        %775 = sbr.rel (%p772) target = $region56
      $region55: #{multi_head_self_attention.3} parent=39 // pred_region
        %v776 = vld [vmem:[#allocation5] sm:$0xff]
        %v777 = vld [vmem:[%s4] sm:$0x1]
        %v779 = vlaneseq
        %v780 = vshrl.u32 %v779, 7
        %v781 = vsub.s32 0, %v780
        %v782 = vrot.slane %v777, %v781
        %v784 = vadd.f32 %v776, %v782
        %vm785 = vcmask 261120
        %786 = vst.msk [vmem:[%s400] sm:$0xff] %vm785, %v784
      $region56: #{multi_head_self_attention.3} parent=39 // pred_fallthru
        _
      %p787 = scmp.lt.s32.totalorder %s22, 1
      %s788 = scalar_select %p787, %s22, 1
      %p789 = scmp.lt.s32.totalorder %s23, 15
      %s790 = scalar_select %p789, %s23, 15
      %s791 = smul.addr %s788, 16
      %s792 = sadd.s32 %s790, %s791
      %s793 = smul.addr %s792, 8
      %s794 = scalar_lea.vmem %s5, %s793
      // Predicated region
      $region57: #{multi_head_self_attention.3} parent=39 // pred_check
        %p795 = pneg %p199
      $region58: #{multi_head_self_attention.3} parent=39 // pred_check_branch
        %797 = sbr.rel (%p795) target = $region60
      $region59: #{multi_head_self_attention.3} parent=39 // pred_region
        _
      $region60: #{multi_head_self_attention.3} parent=39 // pred_fallthru
        _
    $region40: #{multi_head_self_attention.3} parent=5 // pred_fallthru
      _
    %p798 = scmp.le.s32.totalorder 2, %s11
    // Predicated region
    $region61: #{multi_head_self_attention.3} parent=5 // pred_check
      %p799 = pneg %p798
    $region62: #{multi_head_self_attention.3} parent=5 // pred_check_branch
      %801 = sbr.rel (%p799) target = $region64
    $region63: #{multi_head_self_attention.3} parent=5 // pred_region
      %s802 = ssub.s32 %s11, 2
      // Predicated region
      $region65: #{multi_head_self_attention.3} parent=63 // pred_check
        %p803 = pneg %p205
      $region66: #{multi_head_self_attention.3} parent=63 // pred_check_branch
        %805 = sbr.rel (%p803) target = $region68
      $region67: #{multi_head_self_attention.3} parent=63 // pred_region
        %p806 = scmp.lt.s32.totalorder %s26, 1
        %s807 = scalar_select %p806, %s26, 1
        %p808 = scmp.lt.s32.totalorder %s27, 15
        %s809 = scalar_select %p808, %s27, 15
        %s810 = smul.addr %s807, 16
        %s811 = sadd.s32 %s809, %s810
        %s812 = smul.addr %s811, 8
        %s813 = scalar_lea.vmem %s5, %s812
      $region68: #{multi_head_self_attention.3} parent=63 // pred_fallthru
        _
    $region64: #{multi_head_self_attention.3} parent=5 // pred_fallthru
      _
  $region6: #{multi_head_self_attention.3} parent=0 // loop_footer
    %s15 = sadd.s32 1, %s11
  $region7: #{multi_head_self_attention.3} parent=0 // loop_footer_branch
    %10 = sbr.rel target = $region3
  $region8: #{multi_head_self_attention.3} parent=0 // loop_exit
    _

</llo_original>
